<compile_context>
chip_gen: v6e
topology: v6e:2x2x1
jax: 0.10.0
libtpu: 0.0.40
codegen_flags: <defaults>
</compile_context>

<pallas_src>
import functools

import jax
import jax.numpy as jnp
from jax.experimental import pallas as pl
from jax.experimental.pallas import tpu as pltpu


def _round_up(x, m):
    return ((x + m - 1) // m) * m


def _reeig_kernel(eigval_ref, u_ref, out_ref, *, threshold):
    # eigval_ref: (G, 1, n)   u_ref: (G, n, n)   out_ref: (G, n, n)
    lam = jnp.maximum(eigval_ref[...], jnp.float32(threshold))      # (G, 1, n)
    u = u_ref[...]                                                  # (G, n, n)
    # U @ diag(lam): scale column j of U by lam[j] (broadcast over rows).
    w = u * lam                                                     # (G, n, n)
    # out[g] = w[g] @ u[g].T as a batched NT contraction: no materialized
    # transpose, so no XLU vxpose competing with MXU pushes.
    out_ref[...] = jax.lax.dot_general(
        w, u,
        dimension_numbers=(((2,), (2,)), ((0,), (0,))),
        preferred_element_type=jnp.float32,
    ).astype(out_ref.dtype)


def _vmem_capacity_bytes():
    try:
        return int(pltpu.get_tpu_info().vmem_capacity_bytes)
    except Exception:
        return 64 * 1024 * 1024          # conservative fallback (v7x per-core VMEM)


def _choose_group(batch, n, out_itemsize):
    """Matrices per grid step + explicit VMEM limit, sized per TPU generation."""
    cap = _vmem_capacity_bytes()
    # Soft budget: ~2/3 of physical VMEM, capped at 64 MiB.  v5e/v6e have
    # 128 MiB physical (-> 64 MiB budget); v7x only 64 MiB (-> ~42 MiB budget).
    budget = min(64 << 20, (2 * cap) // 3)

    n_lane = _round_up(n, 128)
    mat_tile = _round_up(n, 8) * n_lane
    # Per-matrix VMEM (f32 unless noted): double-buffered U input block (2x)
    # + double-buffered output block (2x, out dtype) + the `U*diag(lam)`
    # intermediate + the dot_general result before store + the double-buffered
    # (1, n) eigenvalue row (tile-padded to (8, n_lane)).
    per_matrix = (2 + 1 + 1) * 4 * mat_tile \
        + 2 * out_itemsize * mat_tile \
        + 2 * 8 * 4 * n_lane

    g = max(1, min(batch, budget // per_matrix))

    # v7x: only 64 MiB VMEM per TensorCore and two TensorCores sharding the
    # "parallel" batch axis -> keep >= ~4 grid steps so neither core idles.
    # v5e/v6e have a single TensorCore: one big block amortizes the ~0.35 us
    # per-grid-step overhead best, so no step-count floor there.
    if cap <= (72 << 20) and batch >= 4:
        g = min(g, -(-batch // 4))

    # Prefer an exact divisor of the batch (no masked partial last block, no
    # wasted compute) when one exists reasonably close to the budget-optimal g;
    # otherwise keep g and let Pallas mask the partial block (still no jnp.pad).
    for d in range(g, 0, -1):
        if batch % d == 0:
            if 3 * d >= 2 * g:
                g = d
            break
    g = int(max(1, g))

    est = g * per_matrix + (2 << 20)
    vmem_limit = int(min(cap, max(budget + (8 << 20), est)))
    return g, vmem_limit


@functools.partial(jax.jit, static_argnames=("threshold", "out_dtype"))
def reeig_forward(X, threshold=1e-5, out_dtype=jnp.float32):
    """ReEigLayer.forward for (n, n) or (..., n, n) symmetric matrices."""
    X = jnp.asarray(X, jnp.float32)
    n = X.shape[-1]
    Xb = X.reshape((-1, n, n))                 # handles (n, n) and (..., n, n)
    B = Xb.shape[0]

    # TODO(synk): torch.linalg.eigh has no Pallas TPU equivalent; batched jnp eigh.
    eigval, U = jnp.linalg.eigh(Xb)            # (B, n), (B, n, n)
    # (B, 1, n) layout: the (g, 1, n) block is tile-legal for any g.  The
    # per-matrix (1, n) -> (8, 128) tile padding is VMEM-side only (it is
    # charged to the VMEM budget in _choose_group); HBM traffic is unchanged.
    eigval = eigval[:, None, :]

    out_dtype = jnp.dtype(out_dtype)
    g, vmem_limit = _choose_group(B, n, out_dtype.itemsize)
    steps = int(pl.cdiv(B, g))                 # partial last block masked by Pallas

    kernel = functools.partial(_reeig_kernel, threshold=float(threshold))

    # U (input index 1) is dead after the kernel: alias it to the output when
    # dtypes match, saving a B*n*n*4-byte HBM allocation.  Identical index maps
    # and read-before-write per block make this safe under the default pipeline.
    alias = {1: 0} if out_dtype == jnp.dtype(jnp.float32) else {}

    # TODO(synk): for n < 128 a lane-dense packing of k=128//n matrices along
    # the last axis would avoid lane-padded tiles, and for a single matrix
    # exceeding the VMEM budget the matmul would need k-tiling with an
    # accumulator; neither is needed at SPDNet-scale n (<= ~400).
    out = pl.pallas_call(
        kernel,
        out_shape=jax.ShapeDtypeStruct((B, n, n), out_dtype),
        grid=(steps,),
        in_specs=[
            pl.BlockSpec((g, 1, n), lambda b: (b, 0, 0)),
            pl.BlockSpec((g, n, n), lambda b: (b, 0, 0)),
        ],
        out_specs=pl.BlockSpec((g, n, n), lambda b: (b, 0, 0)),
        input_output_aliases=alias,
        compiler_params=pltpu.CompilerParams(
            dimension_semantics=("parallel",),
            vmem_limit_bytes=vmem_limit),
        cost_estimate=pl.CostEstimate(
            flops=2 * B * n ** 3 + B * n * n,
            transcendentals=0,
            bytes_accessed=B * n * n * (4 + out_dtype.itemsize) + B * n * 4),
    )(eigval, U)

    return out.reshape(X.shape)


def reeig_reference(X, threshold=1e-5):
    eigval, U = jnp.linalg.eigh(jnp.asarray(X, jnp.float32))
    eigval = jnp.maximum(eigval, jnp.float32(threshold))
    return jnp.einsum("...ij,...j,...kj->...ik", U, eigval, U)


if __name__ == "__main__":
    # Small deterministic SPD batch.
    B, n = 16, 32
    key = jax.random.PRNGKey(0)
    A = jax.random.normal(key, (B, n, n), dtype=jnp.float32)
    X = jnp.einsum("bij,bkj->bik", A, A) + 1e-3 * jnp.eye(n, dtype=jnp.float32)

    # Batched path (grid over the batch axis).
    out = jax.block_until_ready(reeig_forward(X, threshold=1e-5))
    ref = jax.block_until_ready(reeig_reference(X, threshold=1e-5))
    max_err = float(jnp.max(jnp.abs(out - ref)))
    assert max_err < 1e-2, f"batched mismatch vs reference: max abs err = {max_err}"

    # Unbatched path, matching the original module's (n, n) signature.
    out1 = jax.block_until_ready(reeig_forward(X[0], threshold=1e-5))
    max_err1 = float(jnp.max(jnp.abs(out1 - ref[0])))
    assert max_err1 < 1e-2, f"unbatched mismatch vs reference: max abs err = {max_err1}"

    print("KERNEL_OK")
</pallas_src>

<mosaic_0001>
module attributes {stable_mosaic.version = 11 : i64} {
  func.func @_reeig_kernel(%arg0: i32, %arg1: memref<4x1x32xf32, #tpu.memory_space<vmem>>, %arg2: memref<4x32x32xf32, #tpu.memory_space<vmem>>, %arg3: memref<4x32x32xf32, #tpu.memory_space<vmem>>) attributes {dimension_semantics = [#tpu.dimension_semantics<parallel>], iteration_bounds = array<i64: 4>, scalar_prefetch = 0 : i64, scratch_operands = 0 : i64, tpu.core_type = #tpu.core_type<tc>, window_params = [{transform_indices = @transform_0, window_bounds = array<i64: 4, 1, 32>}, {transform_indices = @transform_1, window_bounds = array<i64: 4, 32, 32>}, {transform_indices = @transform_2, window_bounds = array<i64: 4, 32, 32>}]} {
    %c0 = arith.constant 0 : index
    %c0_0 = arith.constant 0 : index
    %c0_1 = arith.constant 0 : index
    %0 = vector.load %arg1[%c0, %c0_0, %c0_1] : memref<4x1x32xf32, #tpu.memory_space<vmem>>, vector<4x1x32xf32>
    %cst = arith.constant 9.99999974E-6 : f32
    %1 = vector.broadcast %cst : f32 to vector<4x1x32xf32>
    %2 = arith.maximumf %0, %1 : vector<4x1x32xf32>
    %c0_2 = arith.constant 0 : index
    %c0_3 = arith.constant 0 : index
    %c0_4 = arith.constant 0 : index
    %3 = vector.load %arg2[%c0_2, %c0_3, %c0_4] : memref<4x32x32xf32, #tpu.memory_space<vmem>>, vector<4x32x32xf32>
    %4 = vector.broadcast %2 : vector<4x1x32xf32> to vector<4x32x32xf32>
    %5 = arith.mulf %3, %4 : vector<4x32x32xf32>
    %cst_5 = arith.constant dense<0.000000e+00> : vector<4x32x32xf32>
    %6 = tpu.matmul %5, %3, %cst_5 {dimension_numbers = #tpu.dot_dimension_numbers<[2], [2], [1], [1], [0, 0, 0, 1, 1, 1], [0], [0]>} : vector<4x32x32xf32>, vector<4x32x32xf32>, vector<4x32x32xf32> -> vector<4x32x32xf32>
    %c0_6 = arith.constant 0 : index
    %c0_7 = arith.constant 0 : index
    %c0_8 = arith.constant 0 : index
    %7 = vector.load %arg3[%c0_6, %c0_7, %c0_8] : memref<4x32x32xf32, #tpu.memory_space<vmem>>, vector<4x32x32xf32>
    tpu.vector_store %arg3[%c0_6, %c0_7, %c0_8], %6 {strides = array<i32>} : memref<4x32x32xf32, #tpu.memory_space<vmem>>, vector<4x32x32xf32>,
    return
  }
  func.func @transform_0(%arg0: i32) -> (i32, i32, i32) {
    %c0_i32 = arith.constant 0 : i32
    %c0_i32_0 = arith.constant 0 : i32
    %c0_i32_1 = arith.constant 0 : i32
    return %arg0, %c0_i32, %c0_i32_0 : i32, i32, i32
  }
  func.func @transform_1(%arg0: i32) -> (i32, i32, i32) {
    %c0_i32 = arith.constant 0 : i32
    %c0_i32_0 = arith.constant 0 : i32
    %c0_i32_1 = arith.constant 0 : i32
    return %arg0, %c0_i32, %c0_i32_0 : i32, i32, i32
  }
  func.func @transform_2(%arg0: i32) -> (i32, i32, i32) {
    %c0_i32 = arith.constant 0 : i32
    %c0_i32_0 = arith.constant 0 : i32
    %c0_i32_1 = arith.constant 0 : i32
    return %arg0, %c0_i32, %c0_i32_0 : i32, i32, i32
  }
}

</mosaic_0001>

<llo_original>
// kernel: custom-call.2
$region0: #{custom-call.2}
  %s0 = inlined_call_operand.vmem [shape: f32[16,16,16], index: 0, kind: input, shape index: {}]
  %s1 = inlined_call_operand.vmem [shape: f32[16,16,16], index: 1, kind: input, shape index: {}]
  %s2 = inlined_call_operand.vmem [shape: f32[16,16,16], index: 2, kind: input, shape index: {}]
  %s3 = inlined_call_operand.vmem [shape: f32[16,16,16], index: 3, kind: input, shape index: {}]
  %s4 = inlined_call_operand.vmem [shape: f32[16,16], index: 4, kind: output, shape index: {0}]
  %s5 = inlined_call_operand.vmem [shape: f32[16,16], index: 5, kind: output, shape index: {1}]
  %s6 = inlined_call_operand.vmem [shape: f32[16,16,16], index: 6, kind: output, shape index: {2}]
  %s7 = inlined_call_operand.vmem [shape: f32[16,16,16], index: 7, kind: output, shape index: {3}]
  %s8 = inlined_call_operand.vmem [shape: f32[16,16,16], index: 8, kind: output, shape index: {4}]
  %s9 = inlined_call_operand.vmem [shape: f32[16,16,16], index: 9, kind: output, shape index: {5}]
  %10 = xla_tuple %s4, %s5, %s6, %s7, %s8, %s9
  $region1: #{custom-call.2} parent=0
    #allocation0 [shape = 'u8[16384]{0}', space=vmem, size = 0x4000, scoped, tag = 'operand span for operand 0']
    #allocation1 [shape = 'u8[16384]{0}', space=vmem, size = 0x4000, scoped, tag = 'operand span for operand 1']
    #allocation2 [shape = 'u8[16384]{0}', space=vmem, size = 0x4000, scoped, tag = 'operand span for operand 2']
    #allocation3 [shape = 'u8[16384]{0}', space=vmem, size = 0x4000, scoped, tag = 'operand span for operand 3']
    #allocation4 [shape = 'u8[8192]{0}', space=vmem, size = 0x2000, scoped, tag = 'operand span for operand 4']
    #allocation5 [shape = 'u8[8192]{0}', space=vmem, size = 0x2000, scoped, tag = 'operand span for operand 5']
    #allocation6 [shape = 'u8[16384]{0}', space=vmem, size = 0x4000, scoped, tag = 'operand span for operand 6']
    #allocation7 [shape = 'u8[16384]{0}', space=vmem, size = 0x4000, scoped, tag = 'operand span for operand 7']
    #allocation8 [shape = 'u8[16384]{0}', space=vmem, size = 0x4000, scoped, tag = 'operand span for operand 8']
    #allocation9 [shape = 'u8[16384]{0}', space=vmem, size = 0x4000, scoped, tag = 'operand span for operand 9']
    loop: start=0, step=1, limit=18
    $region2: #{custom-call.2} parent=1 // loop_pre_header
      _
    $region3: #{custom-call.2} parent=1 // loop_header
      %s12 = sphi 0, %s16
      %p13 = scmp.ge.s32.totalorder %s12, 18
      %s24 = sphi 0, %s26
      %s27 = sphi 0, %s24
      %s28 = sphi 0, %s27
      %s44 = sphi 0, %s28
      %s52 = sphi 0, %s54
      %s55 = sphi 0, %s52
      %s56 = sphi 0, %s55
      %s72 = sphi 0, %s56
    $region4: #{custom-call.2} parent=1 // loop_header_branch
      %15 = sbr.rel (%p13) target = $region8
    $region5: #{custom-call.2} parent=1 // loop_body
      %s17 = ssub.s32 %s12, 1
      %s18 = ssub.s32 %s12, 2
      %s19 = sadd.s32 %s12, 1
      %s20 = sshrl.u32 %s12, 3
      %s21 = sshrl.u32 %s19, 3
      %s22 = ssub.s32 %s20, %s21
      %p23 = scmp.eq.s32.totalorder %s22, 0
      %s25 = sadd.s32 %s24, 1
      %s26 = scalar_select %p23, %s24, %s25
      %p29 = pneg %p23
      %p30 = scmp.eq.s32.totalorder %s12, 15
      %p31 = por %p29, %p30
      %p32 = scmp.ne.s32.totalorder %s24, %s27
      %p33 = scmp.eq.s32.totalorder %s12, 0
      %p34 = por %p32, %p33
      %p35 = scmp.ne.s32.totalorder %s24, %s27
      %p36 = scmp.eq.s32.totalorder %s17, 15
      %p37 = por %p35, %p36
      %p38 = scmp.ne.s32.totalorder %s27, %s28
      %p39 = scmp.eq.s32.totalorder %s17, 0
      %p40 = por %p38, %p39
      %p41 = scmp.ne.s32.totalorder %s27, %s28
      %p42 = scmp.eq.s32.totalorder %s18, 15
      %p43 = por %p41, %p42
      %p45 = scmp.ne.s32.totalorder %s28, %s44
      %p46 = scmp.eq.s32.totalorder %s18, 0
      %p47 = por %p45, %p46
      %s48 = sshrl.u32 %s12, 3
      %s49 = sshrl.u32 %s19, 3
      %s50 = ssub.s32 %s48, %s49
      %p51 = scmp.eq.s32.totalorder %s50, 0
      %s53 = sadd.s32 %s52, 1
      %s54 = scalar_select %p51, %s52, %s53
      %p57 = pneg %p51
      %p58 = scmp.eq.s32.totalorder %s12, 15
      %p59 = por %p57, %p58
      %p60 = scmp.ne.s32.totalorder %s52, %s55
      %p61 = scmp.eq.s32.totalorder %s12, 0
      %p62 = por %p60, %p61
      %p63 = scmp.ne.s32.totalorder %s52, %s55
      %p64 = scmp.eq.s32.totalorder %s17, 15
      %p65 = por %p63, %p64
      %p66 = scmp.ne.s32.totalorder %s55, %s56
      %p67 = scmp.eq.s32.totalorder %s17, 0
      %p68 = por %p66, %p67
      %p69 = scmp.ne.s32.totalorder %s55, %s56
      %p70 = scmp.eq.s32.totalorder %s18, 15
      %p71 = por %p69, %p70
      %p73 = scmp.ne.s32.totalorder %s56, %s72
      %p74 = scmp.eq.s32.totalorder %s18, 0
      %p75 = por %p73, %p74
      %p76 = scmp.le.s32.totalorder 1, %s12
      %p77 = scmp.lt.s32.totalorder %s12, 17
      %p78 = pnand %p76, %p77
      %p79 = pneg %p78
      // Predicated region
      $region9: #{custom-call.2} parent=5 // pred_check
        _
      $region10: #{custom-call.2} parent=5 // pred_check_branch
        %81 = sbr.rel (%p78) target = $region12
      $region11: #{custom-call.2} parent=5 // pred_region
        %s82 = ssub.s32 %s12, 1
      $region12: #{custom-call.2} parent=5 // pred_fallthru
        _
      %p83 = scmp.lt.s32.totalorder %s12, 16
      // Predicated region
      $region13: #{custom-call.2} parent=5 // pred_check
        %p84 = pneg %p83
      $region14: #{custom-call.2} parent=5 // pred_check_branch
        %86 = sbr.rel (%p84) target = $region16
      $region15: #{custom-call.2} parent=5 // pred_region
        %s87 = sand.u32 %s12, 1
        %s88 = sand.u32 %s12, 1
        %s89 = smul.addr %s88, 16
        %s90 = scalar_lea.vmem [#allocation0], %s89
        %s91 = smul.addr %s12, 16
        %s92 = scalar_lea.vmem %s0, %s91
        // Predicated region
        $region17: #{custom-call.2} parent=15 // pred_check
          _
        $region18: #{custom-call.2} parent=15 // pred_check_branch
          %94 = sbr.rel (0) target = $region20
        $region19: #{custom-call.2} parent=15 // pred_region
          // Predicated region
          $region21: #{custom-call.2} parent=19 // pred_check
            _
          $region22: #{custom-call.2} parent=19 // pred_check_branch
            %96 = sbr.rel (0) target = $region24
          $region23: #{custom-call.2} parent=19 // pred_region
            loop: start=0, step=1, limit=1
            $region25: #{custom-call.2} parent=23 // loop_pre_header
              _
            $region26: #{custom-call.2} parent=23 // loop_header
              %s98 = sphi 0, %s102
              %p99 = scmp.ge.s32.totalorder %s98, 1
              %s103 = sphi %s92, %s92
              %s104 = sphi %s90, %s90
            $region27: #{custom-call.2} parent=23 // loop_header_branch
              %101 = sbr.rel (%p99) target = $region31
            $region28: #{custom-call.2} parent=23 // loop_body
              %v105 = vld [vmem:[%s103] sm:$0xff]
              %106 = vst [vmem:[%s104] sm:$0xff] %v105
              %v107 = vld [vmem:[%s103 + $0x8] sm:$0xff]
              %108 = vst [vmem:[%s104 + $0x8] sm:$0xff] %v107
            $region29: #{custom-call.2} parent=23 // loop_footer
              %s102 = sadd.s32 1, %s98
            $region30: #{custom-call.2} parent=23 // loop_footer_branch
              %97 = sbr.rel target = $region26
            $region31: #{custom-call.2} parent=23 // loop_exit
              _
          $region24: #{custom-call.2} parent=19 // pred_fallthru
            _
          // Predicated region
          $region32: #{custom-call.2} parent=19 // pred_check
            _
          $region33: #{custom-call.2} parent=19 // pred_check_branch
            %110 = sbr.rel target = $region35
          $region34: #{custom-call.2} parent=19 // pred_region
            _
          $region35: #{custom-call.2} parent=19 // pred_fallthru
            _
        $region20: #{custom-call.2} parent=15 // pred_fallthru
          _
        %111 = vnop
        %s112 = sand.u32 %s12, 1
        %s113 = sand.u32 %s12, 1
        %s114 = smul.addr %s113, 16
        %s115 = scalar_lea.vmem [#allocation1], %s114
        %s116 = smul.addr %s12, 16
        %s117 = scalar_lea.vmem %s1, %s116
        // Predicated region
        $region36: #{custom-call.2} parent=15 // pred_check
          _
        $region37: #{custom-call.2} parent=15 // pred_check_branch
          %119 = sbr.rel (0) target = $region39
        $region38: #{custom-call.2} parent=15 // pred_region
          // Predicated region
          $region40: #{custom-call.2} parent=38 // pred_check
            _
          $region41: #{custom-call.2} parent=38 // pred_check_branch
            %121 = sbr.rel (0) target = $region43
          $region42: #{custom-call.2} parent=38 // pred_region
            loop: start=0, step=1, limit=1
            $region44: #{custom-call.2} parent=42 // loop_pre_header
              _
            $region45: #{custom-call.2} parent=42 // loop_header
              %s123 = sphi 0, %s127
              %p124 = scmp.ge.s32.totalorder %s123, 1
              %s128 = sphi %s117, %s117
              %s129 = sphi %s115, %s115
            $region46: #{custom-call.2} parent=42 // loop_header_branch
              %126 = sbr.rel (%p124) target = $region50
            $region47: #{custom-call.2} parent=42 // loop_body
              %v130 = vld [vmem:[%s128] sm:$0xff]
              %131 = vst [vmem:[%s129] sm:$0xff] %v130
              %v132 = vld [vmem:[%s128 + $0x8] sm:$0xff]
              %133 = vst [vmem:[%s129 + $0x8] sm:$0xff] %v132
            $region48: #{custom-call.2} parent=42 // loop_footer
              %s127 = sadd.s32 1, %s123
            $region49: #{custom-call.2} parent=42 // loop_footer_branch
              %122 = sbr.rel target = $region45
            $region50: #{custom-call.2} parent=42 // loop_exit
              _
          $region43: #{custom-call.2} parent=38 // pred_fallthru
            _
          // Predicated region
          $region51: #{custom-call.2} parent=38 // pred_check
            _
          $region52: #{custom-call.2} parent=38 // pred_check_branch
            %135 = sbr.rel target = $region54
          $region53: #{custom-call.2} parent=38 // pred_region
            _
          $region54: #{custom-call.2} parent=38 // pred_fallthru
            _
        $region39: #{custom-call.2} parent=15 // pred_fallthru
          _
        %136 = vnop
        %s137 = sand.u32 %s12, 1
        %s138 = sand.u32 %s12, 1
        %s139 = smul.addr %s138, 16
        %s140 = scalar_lea.vmem [#allocation2], %s139
        %s141 = smul.addr %s12, 16
        %s142 = scalar_lea.vmem %s2, %s141
        // Predicated region
        $region55: #{custom-call.2} parent=15 // pred_check
          _
        $region56: #{custom-call.2} parent=15 // pred_check_branch
          %144 = sbr.rel (0) target = $region58
        $region57: #{custom-call.2} parent=15 // pred_region
          // Predicated region
          $region59: #{custom-call.2} parent=57 // pred_check
            _
          $region60: #{custom-call.2} parent=57 // pred_check_branch
            %146 = sbr.rel (0) target = $region62
          $region61: #{custom-call.2} parent=57 // pred_region
            loop: start=0, step=1, limit=1
            $region63: #{custom-call.2} parent=61 // loop_pre_header
              _
            $region64: #{custom-call.2} parent=61 // loop_header
              %s148 = sphi 0, %s152
              %p149 = scmp.ge.s32.totalorder %s148, 1
              %s153 = sphi %s142, %s142
              %s154 = sphi %s140, %s140
            $region65: #{custom-call.2} parent=61 // loop_header_branch
              %151 = sbr.rel (%p149) target = $region69
            $region66: #{custom-call.2} parent=61 // loop_body
              %v155 = vld [vmem:[%s153] sm:$0xff]
              %156 = vst [vmem:[%s154] sm:$0xff] %v155
              %v157 = vld [vmem:[%s153 + $0x8] sm:$0xff]
              %158 = vst [vmem:[%s154 + $0x8] sm:$0xff] %v157
            $region67: #{custom-call.2} parent=61 // loop_footer
              %s152 = sadd.s32 1, %s148
            $region68: #{custom-call.2} parent=61 // loop_footer_branch
              %147 = sbr.rel target = $region64
            $region69: #{custom-call.2} parent=61 // loop_exit
              _
          $region62: #{custom-call.2} parent=57 // pred_fallthru
            _
          // Predicated region
          $region70: #{custom-call.2} parent=57 // pred_check
            _
          $region71: #{custom-call.2} parent=57 // pred_check_branch
            %160 = sbr.rel target = $region73
          $region72: #{custom-call.2} parent=57 // pred_region
            _
          $region73: #{custom-call.2} parent=57 // pred_fallthru
            _
        $region58: #{custom-call.2} parent=15 // pred_fallthru
          _
        %161 = vnop
        %s162 = sand.u32 %s12, 1
        %s163 = sand.u32 %s12, 1
        %s164 = smul.addr %s163, 16
        %s165 = scalar_lea.vmem [#allocation3], %s164
        %s166 = smul.addr %s12, 16
        %s167 = scalar_lea.vmem %s3, %s166
        // Predicated region
        $region74: #{custom-call.2} parent=15 // pred_check
          _
        $region75: #{custom-call.2} parent=15 // pred_check_branch
          %169 = sbr.rel (0) target = $region77
        $region76: #{custom-call.2} parent=15 // pred_region
          // Predicated region
          $region78: #{custom-call.2} parent=76 // pred_check
            _
          $region79: #{custom-call.2} parent=76 // pred_check_branch
            %171 = sbr.rel (0) target = $region81
          $region80: #{custom-call.2} parent=76 // pred_region
            loop: start=0, step=1, limit=1
            $region82: #{custom-call.2} parent=80 // loop_pre_header
              _
            $region83: #{custom-call.2} parent=80 // loop_header
              %s173 = sphi 0, %s177
              %p174 = scmp.ge.s32.totalorder %s173, 1
              %s178 = sphi %s167, %s167
              %s179 = sphi %s165, %s165
            $region84: #{custom-call.2} parent=80 // loop_header_branch
              %176 = sbr.rel (%p174) target = $region88
            $region85: #{custom-call.2} parent=80 // loop_body
              %v180 = vld [vmem:[%s178] sm:$0xff]
              %181 = vst [vmem:[%s179] sm:$0xff] %v180
              %v182 = vld [vmem:[%s178 + $0x8] sm:$0xff]
              %183 = vst [vmem:[%s179 + $0x8] sm:$0xff] %v182
            $region86: #{custom-call.2} parent=80 // loop_footer
              %s177 = sadd.s32 1, %s173
            $region87: #{custom-call.2} parent=80 // loop_footer_branch
              %172 = sbr.rel target = $region83
            $region88: #{custom-call.2} parent=80 // loop_exit
              _
          $region81: #{custom-call.2} parent=76 // pred_fallthru
            _
          // Predicated region
          $region89: #{custom-call.2} parent=76 // pred_check
            _
          $region90: #{custom-call.2} parent=76 // pred_check_branch
            %185 = sbr.rel target = $region92
          $region91: #{custom-call.2} parent=76 // pred_region
            _
          $region92: #{custom-call.2} parent=76 // pred_fallthru
            _
        $region77: #{custom-call.2} parent=15 // pred_fallthru
          _
        %186 = vnop
      $region16: #{custom-call.2} parent=5 // pred_fallthru
        _
      %p187 = scmp.le.s32.totalorder 1, %s12
      %p188 = scmp.lt.s32.totalorder %s12, 17
      %p189 = pnand %p187, %p188
      %p190 = pneg %p189
      // Predicated region
      $region93: #{custom-call.2} parent=5 // pred_check
        _
      $region94: #{custom-call.2} parent=5 // pred_check_branch
        %192 = sbr.rel (%p189) target = $region96
      $region95: #{custom-call.2} parent=5 // pred_region
        #allocation10 [shape = 'f32[16,16]{1,0}', space=vmem, size = 0x2000, scoped, tag = 'a top-left matrix']
        #allocation11 [shape = 'f32[16,16]{1,0}', space=vmem, size = 0x2000, scoped, tag = 'a top-right matrix']
        #allocation12 [shape = 'f32[16,16]{1,0}', space=vmem, size = 0x2000, scoped, tag = 'a bottom-left matrix']
        #allocation13 [shape = 'f32[16,16]{1,0}', space=vmem, size = 0x2000, scoped, tag = 'a bottom-right matrix']
        %s193 = ssub.s32 %s12, 1
        %s194 = sand.u32 %s17, 1
        %s195 = sand.u32 %s17, 1
        %s196 = smul.addr %s195, 16
        %s197 = scalar_lea.vmem [#allocation0], %s196
        %s198 = sand.u32 %s17, 1
        %s199 = sand.u32 %s17, 1
        %s200 = smul.addr %s199, 16
        %s201 = scalar_lea.vmem [#allocation1], %s200
        %s202 = sand.u32 %s17, 1
        %s203 = sand.u32 %s17, 1
        %s204 = smul.addr %s203, 16
        %s205 = scalar_lea.vmem [#allocation2], %s204
        %s206 = sand.u32 %s17, 1
        %s207 = sand.u32 %s17, 1
        %s208 = smul.addr %s207, 16
        %s209 = scalar_lea.vmem [#allocation3], %s208
        %s210 = sand.u32 %s17, 1
        %s211 = sand.u32 %s17, 1
        %s212 = smul.addr %s211, 16
        %s213 = scalar_lea.vmem [#allocation0], %s212
        %s214 = sand.u32 %s17, 1
        %s215 = sand.u32 %s17, 1
        %s216 = smul.addr %s215, 16
        %s217 = scalar_lea.vmem [#allocation1], %s216
        %s218 = sand.u32 %s17, 1
        %s219 = sand.u32 %s17, 1
        %s220 = smul.addr %s219, 16
        %s221 = scalar_lea.vmem [#allocation2], %s220
        %s222 = sand.u32 %s17, 1
        %s223 = sand.u32 %s17, 1
        %s224 = smul.addr %s223, 16
        %s225 = scalar_lea.vmem [#allocation3], %s224
        %p226 = pneg %p40
        %p227 = pneg %p37
        %s228 = sand.u32 %s27, 1
        %s229 = sand.u32 %s27, 1
        %s230 = smul.addr %s229, 8
        %s231 = scalar_lea.vmem [#allocation4], %s230
        %p232 = pneg %p68
        %p233 = pneg %p65
        %s234 = sand.u32 %s55, 1
        %s235 = sand.u32 %s55, 1
        %s236 = smul.addr %s235, 8
        %s237 = scalar_lea.vmem [#allocation5], %s236
        %s238 = sand.u32 %s17, 1
        %s239 = sand.u32 %s17, 1
        %s240 = smul.addr %s239, 16
        %s241 = scalar_lea.vmem [#allocation6], %s240
        %s242 = sand.u32 %s17, 1
        %s243 = sand.u32 %s17, 1
        %s244 = smul.addr %s243, 16
        %s245 = scalar_lea.vmem [#allocation7], %s244
        %s246 = sand.u32 %s17, 1
        %s247 = sand.u32 %s17, 1
        %s248 = smul.addr %s247, 16
        %s249 = scalar_lea.vmem [#allocation8], %s248
        %s250 = sand.u32 %s17, 1
        %s251 = sand.u32 %s17, 1
        %s252 = smul.addr %s251, 16
        %s253 = scalar_lea.vmem [#allocation9], %s252
        %s254 = sshrl.u32 %s17, 3
        %s255 = sshrl.u32 %s17, 3
        %s256 = smov [#allocation10]
        %v257 = vld [vmem:[%s197] sm:$0xff]
        %258 = vst [vmem:[%s256] sm:$0xff] %v257
        %s259 = scalar_lea.vmem %s256, 8
        %s260 = scalar_lea.vmem %s197, 8 [#allocation0]
        %v261 = vld [vmem:[%s260] sm:$0xff]
        %262 = vst [vmem:[%s259] sm:$0xff] %v261
        %s263 = smov [#allocation11]
        %v264 = vld [vmem:[%s201] sm:$0xff]
        %265 = vst [vmem:[%s263] sm:$0xff] %v264
        %s266 = scalar_lea.vmem %s263, 8
        %s267 = scalar_lea.vmem %s201, 8 [#allocation1]
        %v268 = vld [vmem:[%s267] sm:$0xff]
        %269 = vst [vmem:[%s266] sm:$0xff] %v268
        %s270 = smov [#allocation12]
        %v271 = vld [vmem:[%s205] sm:$0xff]
        %272 = vst [vmem:[%s270] sm:$0xff] %v271
        %s273 = scalar_lea.vmem %s270, 8
        %s274 = scalar_lea.vmem %s205, 8 [#allocation2]
        %v275 = vld [vmem:[%s274] sm:$0xff]
        %276 = vst [vmem:[%s273] sm:$0xff] %v275
        %s277 = smov [#allocation13]
        %v278 = vld [vmem:[%s209] sm:$0xff]
        %279 = vst [vmem:[%s277] sm:$0xff] %v278
        %s280 = scalar_lea.vmem %s277, 8
        %s281 = scalar_lea.vmem %s209, 8 [#allocation3]
        %v282 = vld [vmem:[%s281] sm:$0xff]
        %283 = vst [vmem:[%s280] sm:$0xff] %v282
        %284 = vst [vmem:[%s241] sm:$0xff] 0.0
        %s285 = scalar_lea.vmem %s241, 8 [#allocation6]
        %286 = vst [vmem:[%s285] sm:$0xff] 0.0
        %287 = vst [vmem:[%s245] sm:$0xff] 0.0
        %s288 = scalar_lea.vmem %s245, 8 [#allocation7]
        %289 = vst [vmem:[%s288] sm:$0xff] 0.0
        %290 = vst [vmem:[%s249] sm:$0xff] 0.0
        %s291 = scalar_lea.vmem %s249, 8 [#allocation8]
        %292 = vst [vmem:[%s291] sm:$0xff] 0.0
        %293 = vst [vmem:[%s253] sm:$0xff] 0.0
        %s294 = scalar_lea.vmem %s253, 8 [#allocation9]
        %295 = vst [vmem:[%s294] sm:$0xff] 0.0
        %s296 = smov %s241
        %v297 = vlaneseq
        %v298 = vand.u32 %v297, 127
        %v299 = vmov %v298
        %v300 = vlaneseq
        %v301 = vshrl.u32 %v300, 7
        %v302 = vmov %v301
        %v303 = vld [vmem:[%s296] sm:$0xff]
        %vm306 = vcmp.eq.s32.totalorder %v302, %v299
        %v307 = vsel %vm306, 1.0, %v303
        %308 = vst [vmem:[%s296] sm:$0xff] %v307
        %s309 = scalar_lea.vmem %s296, 8
        %v310 = vld [vmem:[%s309] sm:$0xff]
        %v312 = vadd.s32 %v302, 8
        %vm313 = vcmp.eq.s32.totalorder %v312, %v299
        %v314 = vsel %vm313, 1.0, %v310
        %315 = vst [vmem:[%s309] sm:$0xff] %v314
        %s316 = smov %s253
        %v317 = vlaneseq
        %v318 = vand.u32 %v317, 127
        %v319 = vmov %v318
        %v320 = vlaneseq
        %v321 = vshrl.u32 %v320, 7
        %v322 = vmov %v321
        %v323 = vld [vmem:[%s316] sm:$0xff]
        %vm326 = vcmp.eq.s32.totalorder %v322, %v319
        %v327 = vsel %vm326, 1.0, %v323
        %328 = vst [vmem:[%s316] sm:$0xff] %v327
        %s329 = scalar_lea.vmem %s316, 8
        %v330 = vld [vmem:[%s329] sm:$0xff]
        %v332 = vadd.s32 %v322, 8
        %vm333 = vcmp.eq.s32.totalorder %v332, %v319
        %v334 = vsel %vm333, 1.0, %v330
        %335 = vst [vmem:[%s329] sm:$0xff] %v334
        // While loop
        $region97: #{custom-call.2} parent=95 // loop_pre_header
          _
        $region98: #{custom-call.2} parent=95 // loop_header
          %s337 = sphi 0, %s1235
          %v338 = vlaneseq
          %v339 = vand.u32 %v338, 127
          %v340 = vmov %v339
          %v341 = vlaneseq
          %v342 = vshrl.u32 %v341, 7
          %v343 = vmov %v342
          %s344 = smov [#allocation10]
          %v345 = vlaneseq
          %v346 = vand.u32 %v345, 127
          %vm347 = vcmp.ge.s32.totalorder %v346, 0
          %vm348 = vcmp.lt.s32.totalorder %v346, 16
          %vm349 = vmand %vm347, %vm348
          %v350 = vld [vmem:[%s344] sm:$0xff]
          %v351 = vsel %vm349, %v350, 0.0
          %v352 = vmul.f32 %v351, %v351
          %vm355 = vcmp.eq.s32.totalorder %v343, %v340
          %v356 = vsel %vm355, 0.0, %v352
          %s357 = scalar_lea.vmem %s344, 8
          %v358 = vld [vmem:[%s357] sm:$0xff]
          %v359 = vsel %vm349, %v358, 0.0
          %v360 = vmul.f32 %v359, %v359
          %v362 = vadd.s32 %v343, 8
          %vm363 = vcmp.eq.s32.totalorder %v362, %v340
          %v364 = vsel %vm363, 0.0, %v360
          %v365 = vadd.f32 %v356, %v364
          %v366 = vadd.f32 %v352, %v360
          %v367 = vlaneseq
          %v368 = vand.u32 %v367, 127
          %v369 = vmov %v368
          %v370 = vlaneseq
          %v371 = vshrl.u32 %v370, 7
          %v372 = vmov %v371
          %s373 = smov [#allocation11]
          %v374 = vlaneseq
          %v375 = vand.u32 %v374, 127
          %vm376 = vcmp.ge.s32.totalorder %v375, 0
          %vm377 = vcmp.lt.s32.totalorder %v375, 16
          %vm378 = vmand %vm376, %vm377
          %v379 = vld [vmem:[%s373] sm:$0xff]
          %v380 = vsel %vm378, %v379, 0.0
          %v381 = vmul.f32 %v380, %v380
          %v382 = vadd.f32 %v365, %v381
          %v383 = vadd.f32 %v366, %v381
          %s384 = scalar_lea.vmem %s373, 8
          %v385 = vld [vmem:[%s384] sm:$0xff]
          %v386 = vsel %vm378, %v385, 0.0
          %v387 = vmul.f32 %v386, %v386
          %v388 = vadd.f32 %v382, %v387
          %v389 = vadd.f32 %v383, %v387
          %v390 = vlaneseq
          %v391 = vand.u32 %v390, 127
          %v392 = vmov %v391
          %v393 = vlaneseq
          %v394 = vshrl.u32 %v393, 7
          %v395 = vmov %v394
          %s396 = smov [#allocation12]
          %v397 = vlaneseq
          %v398 = vand.u32 %v397, 127
          %vm399 = vcmp.ge.s32.totalorder %v398, 0
          %vm400 = vcmp.lt.s32.totalorder %v398, 16
          %vm401 = vmand %vm399, %vm400
          %v402 = vld [vmem:[%s396] sm:$0xff]
          %v403 = vsel %vm401, %v402, 0.0
          %v404 = vmul.f32 %v403, %v403
          %v405 = vadd.f32 %v388, %v404
          %v406 = vadd.f32 %v389, %v404
          %s407 = scalar_lea.vmem %s396, 8
          %v408 = vld [vmem:[%s407] sm:$0xff]
          %v409 = vsel %vm401, %v408, 0.0
          %v410 = vmul.f32 %v409, %v409
          %v411 = vadd.f32 %v405, %v410
          %v412 = vadd.f32 %v406, %v410
          %v413 = vlaneseq
          %v414 = vand.u32 %v413, 127
          %v415 = vmov %v414
          %v416 = vlaneseq
          %v417 = vshrl.u32 %v416, 7
          %v418 = vmov %v417
          %s419 = smov [#allocation13]
          %v420 = vlaneseq
          %v421 = vand.u32 %v420, 127
          %vm422 = vcmp.ge.s32.totalorder %v421, 0
          %vm423 = vcmp.lt.s32.totalorder %v421, 16
          %vm424 = vmand %vm422, %vm423
          %v425 = vld [vmem:[%s419] sm:$0xff]
          %v426 = vsel %vm424, %v425, 0.0
          %v427 = vmul.f32 %v426, %v426
          %vm430 = vcmp.eq.s32.totalorder %v418, %v415
          %v431 = vsel %vm430, 0.0, %v427
          %v432 = vadd.f32 %v411, %v431
          %v433 = vadd.f32 %v412, %v427
          %s434 = scalar_lea.vmem %s419, 8
          %v435 = vld [vmem:[%s434] sm:$0xff]
          %v436 = vsel %vm424, %v435, 0.0
          %v437 = vmul.f32 %v436, %v436
          %v439 = vadd.s32 %v418, 8
          %vm440 = vcmp.eq.s32.totalorder %v439, %v415
          %v441 = vsel %vm440, 0.0, %v437
          %v442 = vadd.f32 %v432, %v441
          %v443 = vadd.f32 %v433, %v437
          %444 = vadd.xlane.f32.xlu0 %v443
          %v445 = vpop.xlane.xlu0 %444
          %v446 = vrot.slane %v445, 4
          %v447 = vadd.f32 %v445, %v446
          %v448 = vrot.slane %v447, 2
          %v449 = vadd.f32 %v447, %v448
          %v450 = vrot.slane %v449, 1
          %v451 = vadd.f32 %v449, %v450
          %452 = vadd.xlane.f32.xlu0 %v442
          %v453 = vpop.xlane.xlu0 %452
          %v454 = vrot.slane %v453, 4
          %v455 = vadd.f32 %v453, %v454
          %v456 = vrot.slane %v455, 2
          %v457 = vadd.f32 %v455, %v456
          %v458 = vrot.slane %v457, 1
          %v459 = vadd.f32 %v457, %v458
          %s460 = vtos %v459
          %s461 = vtos %v451
          %s462 = smul.f32 1e-10, %s461
          %p463 = scmp.le.f32.partialorder %s460, %s462
          %p464 = scmp.ge.s32.totalorder %s337, 15
          %p465 = por %p463, %p464
        $region99: #{custom-call.2} parent=95 // loop_header_branch
          %1237 = sbr.rel (%p465) target = $region103
        $region100: #{custom-call.2} parent=95 // loop_body
          loop: start=0, step=1, limit=31
          $region104: #{custom-call.2} parent=100 // loop_pre_header
            _
          $region105: #{custom-call.2} parent=100 // loop_header
            %s467 = sphi 0, %s471
            %p468 = scmp.ge.s32.totalorder %s467, 31
          $region106: #{custom-call.2} parent=100 // loop_header_branch
            %470 = sbr.rel (%p468) target = $region110
          $region107: #{custom-call.2} parent=100 // loop_body
            #allocation14 [shape = 'f32[1024]{0}', space=vmem, size = 0x1000, scoped, tag = 'a_tl_diag vmem']
            #allocation15 [shape = 'f32[1024]{0}', space=vmem, size = 0x1000, scoped, tag = 'a_tr_diag vmem']
            #allocation16 [shape = 'f32[1024]{0}', space=vmem, size = 0x1000, scoped, tag = 'a_br_diag vmem']
            #allocation17 [shape = 'f32[1024]{0}', space=vmem, size = 0x1000, scoped, tag = 'rt1 vmem']
            #allocation18 [shape = 'f32[1024]{0}', space=vmem, size = 0x1000, scoped, tag = 'rt2 vmem']
            #allocation19 [shape = 'f32[1024]{0}', space=vmem, size = 0x1000, scoped, tag = 'c vmem']
            #allocation20 [shape = 'f32[1024]{0}', space=vmem, size = 0x1000, scoped, tag = 's vmem']
            #allocation21 [shape = 'f32[8192]{0}', space=vmem, size = 0x8000, scoped, tag = 'c broadcast']
            #allocation22 [shape = 'f32[8192]{0}', space=vmem, size = 0x8000, scoped, tag = 's broadcast']
            %s472 = smov [#allocation10]
            %s473 = smov [#allocation14]
            %v474 = vlaneseq
            %v475 = vand.u32 %v474, 127
            %v476 = vmov %v475
            %v477 = vlaneseq
            %v478 = vshrl.u32 %v477, 7
            %v479 = vmov %v478
            %v480 = vld [vmem:[%s472] sm:$0xff]
            %vm483 = vcmp.eq.s32.totalorder %v479, %v476
            %v484 = vsel %vm483, %v480, 0.0
            %s485 = scalar_lea.vmem %s472, 8
            %v486 = vld [vmem:[%s485] sm:$0xff]
            %v488 = vadd.s32 %v479, 8
            %vm489 = vcmp.eq.s32.totalorder %v488, %v476
            %v490 = vsel %vm489, %v486, %v484
            %v491 = vrot.slane %v490, 4
            %v492 = vadd.f32 %v490, %v491
            %v493 = vrot.slane %v492, 2
            %v494 = vadd.f32 %v492, %v493
            %v495 = vrot.slane %v494, 1
            %v496 = vadd.f32 %v494, %v495
            %497 = vst [vmem:[%s473] sm:$0x1] %v496
            %s498 = smov [#allocation11]
            %s499 = smov [#allocation15]
            %v500 = vlaneseq
            %v501 = vand.u32 %v500, 127
            %v502 = vmov %v501
            %v503 = vlaneseq
            %v504 = vshrl.u32 %v503, 7
            %v505 = vmov %v504
            %v506 = vld [vmem:[%s498] sm:$0xff]
            %vm509 = vcmp.eq.s32.totalorder %v505, %v502
            %v510 = vsel %vm509, %v506, 0.0
            %s511 = scalar_lea.vmem %s498, 8
            %v512 = vld [vmem:[%s511] sm:$0xff]
            %v514 = vadd.s32 %v505, 8
            %vm515 = vcmp.eq.s32.totalorder %v514, %v502
            %v516 = vsel %vm515, %v512, %v510
            %v517 = vrot.slane %v516, 4
            %v518 = vadd.f32 %v516, %v517
            %v519 = vrot.slane %v518, 2
            %v520 = vadd.f32 %v518, %v519
            %v521 = vrot.slane %v520, 1
            %v522 = vadd.f32 %v520, %v521
            %523 = vst [vmem:[%s499] sm:$0x1] %v522
            %s524 = smov [#allocation13]
            %s525 = smov [#allocation16]
            %v526 = vlaneseq
            %v527 = vand.u32 %v526, 127
            %v528 = vmov %v527
            %v529 = vlaneseq
            %v530 = vshrl.u32 %v529, 7
            %v531 = vmov %v530
            %v532 = vld [vmem:[%s524] sm:$0xff]
            %vm535 = vcmp.eq.s32.totalorder %v531, %v528
            %v536 = vsel %vm535, %v532, 0.0
            %s537 = scalar_lea.vmem %s524, 8
            %v538 = vld [vmem:[%s537] sm:$0xff]
            %v540 = vadd.s32 %v531, 8
            %vm541 = vcmp.eq.s32.totalorder %v540, %v528
            %v542 = vsel %vm541, %v538, %v536
            %v543 = vrot.slane %v542, 4
            %v544 = vadd.f32 %v542, %v543
            %v545 = vrot.slane %v544, 2
            %v546 = vadd.f32 %v544, %v545
            %v547 = vrot.slane %v546, 1
            %v548 = vadd.f32 %v546, %v547
            %549 = vst [vmem:[%s525] sm:$0x1] %v548
            %s550 = smov [#allocation19]
            %s551 = smov [#allocation20]
            %s552 = smov [#allocation14]
            %v553 = vld [vmem:[%s552] sm:$0xff]
            %s554 = smov [#allocation15]
            %v555 = vld [vmem:[%s554] sm:$0xff]
            %s556 = smov [#allocation16]
            %v557 = vld [vmem:[%s556] sm:$0xff]
            %v558 = vsub.f32 %v557, %v553
            %v559 = vmul.f32 2.0, %v555
            %v560 = vrcp.pop %v559
            %v561 = vmul.f32 %v558, %v560
            %vm562 = vcmp.ge.f32.partialorder %v561, 0.0
            %v563 = vmul.f32 %v561, %v561
            %v564 = vadd.f32 1.0, %v563
            %v565 = vrsqrt.pop %v564
            %v566 = vmul.f32 %v564, %v565
            %vm567 = vcmp.eq.f32.partialorder %v564, inf
            %v568 = vsel %vm567, %v564, %v566
            %vm569 = vcmp.eq.f32.partialorder %v564, 0.0
            %v570 = vand.u32 %v564, 2147483648
            %v571 = vsel %vm569, %v570, %v568
            %v572 = vxor.u32 %v571, 2147483648
            %v573 = vsel %vm562, %v571, %v572
            %v574 = vadd.f32 %v561, %v573
            %v575 = vrcp.pop %v574
            %v576 = vand.u32 2147483647, %v553
            %v577 = vand.u32 2147483647, %v555
            %v578 = vand.u32 2147483647, %v557
            %v579 = vmin.f32 %v576, %v578
            %v580 = vmul.f32 1.1920929e-08, %v579
            %vm581 = vcmp.le.f32.partialorder %v577, %v580
            %v582 = vsel %vm581, 0.0, %v575
            %v583 = vmul.f32 %v582, %v582
            %v584 = vadd.f32 1.0, %v583
            %v585 = vrsqrt.pop %v584
            %v586 = vmul.f32 %v582, %v585
            %v587 = vmul.f32 %v582, %v555
            %v588 = vsub.f32 %v553, %v587
            %v589 = vmul.f32 %v582, %v555
            %v590 = vadd.f32 %v557, %v589
            %s591 = smov [#allocation17]
            %592 = vst [vmem:[%s591] sm:$0xff] %v588
            %s593 = smov [#allocation18]
            %594 = vst [vmem:[%s593] sm:$0xff] %v590
            %s595 = smov %s550
            %596 = vst [vmem:[%s595] sm:$0xff] %v585
            %s597 = smov %s551
            %598 = vst [vmem:[%s597] sm:$0xff] %v586
            %s599 = smov [#allocation19]
            %v600 = vld [vmem:[%s599] ss:$0 sm:$0xff]
            %v601 = vlaneseq
            %v602 = vand.u32 %v601, 127
            %v603 = vmov %v602
            %v604 = vlaneseq
            %v605 = vshrl.u32 %v604, 7
            %v606 = vmov %v605
            %vm608 = vcmp.eq.s32.totalorder %v606, %v603
            %v609 = vsel %vm608, %v600, 0.0
            %610 = vadd.xlane.f32.xlu0 %v609
            %v611 = vpop.xlane.xlu0 %610
            %s612 = smov [#allocation21]
            %613 = vst [vmem:[%s612] sm:$0xff] %v611
            %s614 = smov [#allocation19]
            %v615 = vld [vmem:[%s614] ss:$0 sm:$0xff]
            %v616 = vlaneseq
            %v617 = vand.u32 %v616, 127
            %v618 = vmov %v617
            %v619 = vlaneseq
            %v620 = vshrl.u32 %v619, 7
            %v621 = vmov %v620
            %v622 = vadd.s32 %v621, 8
            %vm623 = vcmp.eq.s32.totalorder %v622, %v618
            %v624 = vsel %vm623, %v615, 0.0
            %625 = vadd.xlane.f32.xlu0 %v624
            %v626 = vpop.xlane.xlu0 %625
            %s627 = smov [#allocation21]
            %s628 = scalar_lea.vmem %s627, 8
            %629 = vst [vmem:[%s628] sm:$0xff] %v626
            %s630 = smov [#allocation20]
            %v631 = vld [vmem:[%s630] ss:$0 sm:$0xff]
            %v632 = vlaneseq
            %v633 = vand.u32 %v632, 127
            %v634 = vmov %v633
            %v635 = vlaneseq
            %v636 = vshrl.u32 %v635, 7
            %v637 = vmov %v636
            %vm639 = vcmp.eq.s32.totalorder %v637, %v634
            %v640 = vsel %vm639, %v631, 0.0
            %641 = vadd.xlane.f32.xlu0 %v640
            %v642 = vpop.xlane.xlu0 %641
            %s643 = smov [#allocation22]
            %644 = vst [vmem:[%s643] sm:$0xff] %v642
            %s645 = smov [#allocation20]
            %v646 = vld [vmem:[%s645] ss:$0 sm:$0xff]
            %v647 = vlaneseq
            %v648 = vand.u32 %v647, 127
            %v649 = vmov %v648
            %v650 = vlaneseq
            %v651 = vshrl.u32 %v650, 7
            %v652 = vmov %v651
            %v653 = vadd.s32 %v652, 8
            %vm654 = vcmp.eq.s32.totalorder %v653, %v649
            %v655 = vsel %vm654, %v646, 0.0
            %656 = vadd.xlane.f32.xlu0 %v655
            %v657 = vpop.xlane.xlu0 %656
            %s658 = smov [#allocation22]
            %s659 = scalar_lea.vmem %s658, 8
            %660 = vst [vmem:[%s659] sm:$0xff] %v657
            %s661 = smov [#allocation21]
            %v662 = vld [vmem:[%s661] sm:$0xff]
            %s663 = smov [#allocation22]
            %v664 = vld [vmem:[%s663] sm:$0xff]
            %s665 = smov [#allocation10]
            %s666 = smov [#allocation11]
            %s667 = smov [#allocation12]
            %s668 = smov [#allocation13]
            %v669 = vld [vmem:[%s665] sm:$0xff]
            %v670 = vld [vmem:[%s666] sm:$0xff]
            %v671 = vld [vmem:[%s667] sm:$0xff]
            %v672 = vld [vmem:[%s668] sm:$0xff]
            %v673 = vmul.f32 %v662, %v669
            %v674 = vmul.f32 %v664, %v671
            %v675 = vsub.f32 %v673, %v674
            %v676 = vmul.f32 %v662, %v670
            %v677 = vmul.f32 %v664, %v672
            %v678 = vsub.f32 %v676, %v677
            %v679 = vmul.f32 %v664, %v669
            %v680 = vmul.f32 %v662, %v671
            %v681 = vadd.f32 %v679, %v680
            %v682 = vmul.f32 %v664, %v670
            %v683 = vmul.f32 %v662, %v672
            %v684 = vadd.f32 %v682, %v683
            %685 = vst [vmem:[%s665] sm:$0xff] %v675
            %686 = vst [vmem:[%s666] sm:$0xff] %v678
            %687 = vst [vmem:[%s667] sm:$0xff] %v681
            %688 = vst [vmem:[%s668] sm:$0xff] %v684
            %s689 = smov [#allocation21]
            %s690 = scalar_lea.vmem %s689, 8
            %v691 = vld [vmem:[%s690] sm:$0xff]
            %s692 = smov [#allocation22]
            %s693 = scalar_lea.vmem %s692, 8
            %v694 = vld [vmem:[%s693] sm:$0xff]
            %s695 = smov [#allocation10]
            %s696 = scalar_lea.vmem %s695, 8
            %s697 = smov [#allocation11]
            %s698 = scalar_lea.vmem %s697, 8
            %s699 = smov [#allocation12]
            %s700 = scalar_lea.vmem %s699, 8
            %s701 = smov [#allocation13]
            %s702 = scalar_lea.vmem %s701, 8
            %v703 = vld [vmem:[%s696] sm:$0xff]
            %v704 = vld [vmem:[%s698] sm:$0xff]
            %v705 = vld [vmem:[%s700] sm:$0xff]
            %v706 = vld [vmem:[%s702] sm:$0xff]
            %v707 = vmul.f32 %v691, %v703
            %v708 = vmul.f32 %v694, %v705
            %v709 = vsub.f32 %v707, %v708
            %v710 = vmul.f32 %v691, %v704
            %v711 = vmul.f32 %v694, %v706
            %v712 = vsub.f32 %v710, %v711
            %v713 = vmul.f32 %v694, %v703
            %v714 = vmul.f32 %v691, %v705
            %v715 = vadd.f32 %v713, %v714
            %v716 = vmul.f32 %v694, %v704
            %v717 = vmul.f32 %v691, %v706
            %v718 = vadd.f32 %v716, %v717
            %719 = vst [vmem:[%s696] sm:$0xff] %v709
            %720 = vst [vmem:[%s698] sm:$0xff] %v712
            %721 = vst [vmem:[%s700] sm:$0xff] %v715
            %722 = vst [vmem:[%s702] sm:$0xff] %v718
            %s723 = smov [#allocation19]
            %v724 = vld [vmem:[%s723] ss:$0 sm:$0xff]
            %s725 = smov [#allocation20]
            %v726 = vld [vmem:[%s725] ss:$0 sm:$0xff]
            %s727 = smov [#allocation10]
            %s728 = smov [#allocation11]
            %s729 = smov [#allocation12]
            %s730 = smov [#allocation13]
            %v731 = vld [vmem:[%s727] sm:$0xff]
            %v732 = vld [vmem:[%s728] sm:$0xff]
            %v733 = vld [vmem:[%s729] sm:$0xff]
            %v734 = vld [vmem:[%s730] sm:$0xff]
            %v735 = vmul.f32 %v724, %v731
            %v736 = vmul.f32 %v726, %v732
            %v737 = vsub.f32 %v735, %v736
            %v738 = vmul.f32 %v726, %v731
            %v739 = vmul.f32 %v724, %v732
            %v740 = vadd.f32 %v738, %v739
            %v741 = vmul.f32 %v724, %v733
            %v742 = vmul.f32 %v726, %v734
            %v743 = vsub.f32 %v741, %v742
            %v744 = vmul.f32 %v726, %v733
            %v745 = vmul.f32 %v724, %v734
            %v746 = vadd.f32 %v744, %v745
            %747 = vst [vmem:[%s727] sm:$0xff] %v737
            %748 = vst [vmem:[%s728] sm:$0xff] %v740
            %749 = vst [vmem:[%s729] sm:$0xff] %v743
            %750 = vst [vmem:[%s730] sm:$0xff] %v746
            %s751 = smov [#allocation10]
            %s752 = scalar_lea.vmem %s751, 8
            %s753 = smov [#allocation11]
            %s754 = scalar_lea.vmem %s753, 8
            %s755 = smov [#allocation12]
            %s756 = scalar_lea.vmem %s755, 8
            %s757 = smov [#allocation13]
            %s758 = scalar_lea.vmem %s757, 8
            %v759 = vld [vmem:[%s752] sm:$0xff]
            %v760 = vld [vmem:[%s754] sm:$0xff]
            %v761 = vld [vmem:[%s756] sm:$0xff]
            %v762 = vld [vmem:[%s758] sm:$0xff]
            %v763 = vmul.f32 %v724, %v759
            %v764 = vmul.f32 %v726, %v760
            %v765 = vsub.f32 %v763, %v764
            %v766 = vmul.f32 %v726, %v759
            %v767 = vmul.f32 %v724, %v760
            %v768 = vadd.f32 %v766, %v767
            %v769 = vmul.f32 %v724, %v761
            %v770 = vmul.f32 %v726, %v762
            %v771 = vsub.f32 %v769, %v770
            %v772 = vmul.f32 %v726, %v761
            %v773 = vmul.f32 %v724, %v762
            %v774 = vadd.f32 %v772, %v773
            %775 = vst [vmem:[%s752] sm:$0xff] %v765
            %776 = vst [vmem:[%s754] sm:$0xff] %v768
            %777 = vst [vmem:[%s756] sm:$0xff] %v771
            %778 = vst [vmem:[%s758] sm:$0xff] %v774
            %s779 = smov [#allocation10]
            %s780 = smov [#allocation17]
            %v781 = vlaneseq
            %v782 = vand.u32 %v781, 127
            %v783 = vmov %v782
            %v784 = vlaneseq
            %v785 = vshrl.u32 %v784, 7
            %v786 = vmov %v785
            %v787 = vld [vmem:[%s780] ss:$0 sm:$0xff]
            %v788 = vld [vmem:[%s779] sm:$0xff]
            %vm791 = vcmp.eq.s32.totalorder %v786, %v783
            %v792 = vsel %vm791, %v787, %v788
            %793 = vst [vmem:[%s779] sm:$0xff] %v792
            %v794 = vld [vmem:[%s780] ss:$0 sm:$0xff]
            %s795 = scalar_lea.vmem %s779, 8
            %v796 = vld [vmem:[%s795] sm:$0xff]
            %v798 = vadd.s32 %v786, 8
            %vm799 = vcmp.eq.s32.totalorder %v798, %v783
            %v800 = vsel %vm799, %v794, %v796
            %801 = vst [vmem:[%s795] sm:$0xff] %v800
            %s802 = smov [#allocation11]
            %v803 = vlaneseq
            %v804 = vand.u32 %v803, 127
            %v805 = vmov %v804
            %v806 = vlaneseq
            %v807 = vshrl.u32 %v806, 7
            %v808 = vmov %v807
            %v809 = vld [vmem:[%s802] sm:$0xff]
            %vm812 = vcmp.eq.s32.totalorder %v808, %v805
            %v813 = vsel %vm812, 0.0, %v809
            %814 = vst [vmem:[%s802] sm:$0xff] %v813
            %s815 = scalar_lea.vmem %s802, 8
            %v816 = vld [vmem:[%s815] sm:$0xff]
            %v818 = vadd.s32 %v808, 8
            %vm819 = vcmp.eq.s32.totalorder %v818, %v805
            %v820 = vsel %vm819, 0.0, %v816
            %821 = vst [vmem:[%s815] sm:$0xff] %v820
            %s822 = smov [#allocation12]
            %v823 = vlaneseq
            %v824 = vand.u32 %v823, 127
            %v825 = vmov %v824
            %v826 = vlaneseq
            %v827 = vshrl.u32 %v826, 7
            %v828 = vmov %v827
            %v829 = vld [vmem:[%s822] sm:$0xff]
            %vm832 = vcmp.eq.s32.totalorder %v828, %v825
            %v833 = vsel %vm832, 0.0, %v829
            %834 = vst [vmem:[%s822] sm:$0xff] %v833
            %s835 = scalar_lea.vmem %s822, 8
            %v836 = vld [vmem:[%s835] sm:$0xff]
            %v838 = vadd.s32 %v828, 8
            %vm839 = vcmp.eq.s32.totalorder %v838, %v825
            %v840 = vsel %vm839, 0.0, %v836
            %841 = vst [vmem:[%s835] sm:$0xff] %v840
            %s842 = smov [#allocation13]
            %s843 = smov [#allocation18]
            %v844 = vlaneseq
            %v845 = vand.u32 %v844, 127
            %v846 = vmov %v845
            %v847 = vlaneseq
            %v848 = vshrl.u32 %v847, 7
            %v849 = vmov %v848
            %v850 = vld [vmem:[%s843] ss:$0 sm:$0xff]
            %v851 = vld [vmem:[%s842] sm:$0xff]
            %vm854 = vcmp.eq.s32.totalorder %v849, %v846
            %v855 = vsel %vm854, %v850, %v851
            %856 = vst [vmem:[%s842] sm:$0xff] %v855
            %v857 = vld [vmem:[%s843] ss:$0 sm:$0xff]
            %s858 = scalar_lea.vmem %s842, 8
            %v859 = vld [vmem:[%s858] sm:$0xff]
            %v861 = vadd.s32 %v849, 8
            %vm862 = vcmp.eq.s32.totalorder %v861, %v846
            %v863 = vsel %vm862, %v857, %v859
            %864 = vst [vmem:[%s858] sm:$0xff] %v863
            %s865 = smov [#allocation10]
            %s866 = smov [#allocation11]
            %v867 = vld [vmem:[%s866] sm:$0xff]
            %868 = vrot.lane.b32.xlu0 %v867, 1
            %v869 = vpop.permute.xlu0 %868
            %v870 = vld [vmem:[%s865] sm:$0xff]
            %v871 = vld [vmem:[%s865] sm:$0xff]
            %872 = vrot.lane.b32.xlu0 %v871, 1
            %v873 = vpop.permute.xlu0 %872
            %v874 = vlaneseq
            %v875 = vand.u32 %v874, 127
            %vm876 = vcmp.eq.s32.totalorder %v875, 0
            %v877 = vsel %vm876, %v871, %v873
            %v878 = vlaneseq
            %v879 = vand.u32 %v878, 127
            %vm880 = vcmp.eq.s32.totalorder %v879, 1
            %v881 = vsel %vm880, %v869, %v877
            %v882 = vlaneseq
            %v883 = vand.u32 %v882, 127
            %vm884 = vcmp.ge.s32.totalorder %v883, 0
            %vm885 = vcmp.lt.s32.totalorder %v883, 16
            %vm886 = vmand %vm884, %vm885
            %v887 = vsel %vm886, %v881, 0.0
            %v888 = vld [vmem:[%s866] sm:$0xff]
            %889 = vrot.lane.b32.xlu0 %v888, 127
            %v890 = vpop.permute.xlu0 %889
            %v891 = vlaneseq
            %v892 = vand.u32 %v891, 127
            %vm893 = vcmp.eq.s32.totalorder %v892, 15
            %v894 = vsel %vm893, %v870, %v890
            %s895 = smov [#allocation10]
            %s896 = scalar_lea.vmem %s895, 8
            %s897 = smov [#allocation11]
            %s898 = scalar_lea.vmem %s897, 8
            %v899 = vld [vmem:[%s898] sm:$0xff]
            %900 = vrot.lane.b32.xlu0 %v899, 1
            %v901 = vpop.permute.xlu0 %900
            %v902 = vld [vmem:[%s896] sm:$0xff]
            %v903 = vld [vmem:[%s896] sm:$0xff]
            %904 = vrot.lane.b32.xlu0 %v903, 1
            %v905 = vpop.permute.xlu0 %904
            %v906 = vlaneseq
            %v907 = vand.u32 %v906, 127
            %vm908 = vcmp.eq.s32.totalorder %v907, 0
            %v909 = vsel %vm908, %v903, %v905
            %v910 = vlaneseq
            %v911 = vand.u32 %v910, 127
            %vm912 = vcmp.eq.s32.totalorder %v911, 1
            %v913 = vsel %vm912, %v901, %v909
            %v914 = vlaneseq
            %v915 = vand.u32 %v914, 127
            %vm916 = vcmp.ge.s32.totalorder %v915, 0
            %vm917 = vcmp.lt.s32.totalorder %v915, 16
            %vm918 = vmand %vm916, %vm917
            %v919 = vsel %vm918, %v913, 0.0
            %v920 = vld [vmem:[%s898] sm:$0xff]
            %921 = vrot.lane.b32.xlu0 %v920, 127
            %v922 = vpop.permute.xlu0 %921
            %v923 = vlaneseq
            %v924 = vand.u32 %v923, 127
            %vm925 = vcmp.eq.s32.totalorder %v924, 15
            %v926 = vsel %vm925, %v902, %v922
            %927 = vst [vmem:[%s865] sm:$0xff] %v887
            %928 = vst [vmem:[%s866] sm:$0xff] %v894
            %929 = vst [vmem:[%s896] sm:$0xff] %v919
            %930 = vst [vmem:[%s898] sm:$0xff] %v926
            %s931 = smov [#allocation12]
            %s932 = smov [#allocation13]
            %v933 = vld [vmem:[%s932] sm:$0xff]
            %934 = vrot.lane.b32.xlu0 %v933, 1
            %v935 = vpop.permute.xlu0 %934
            %v936 = vld [vmem:[%s931] sm:$0xff]
            %v937 = vld [vmem:[%s931] sm:$0xff]
            %938 = vrot.lane.b32.xlu0 %v937, 1
            %v939 = vpop.permute.xlu0 %938
            %v940 = vlaneseq
            %v941 = vand.u32 %v940, 127
            %vm942 = vcmp.eq.s32.totalorder %v941, 0
            %v943 = vsel %vm942, %v937, %v939
            %v944 = vlaneseq
            %v945 = vand.u32 %v944, 127
            %vm946 = vcmp.eq.s32.totalorder %v945, 1
            %v947 = vsel %vm946, %v935, %v943
            %v948 = vlaneseq
            %v949 = vand.u32 %v948, 127
            %vm950 = vcmp.ge.s32.totalorder %v949, 0
            %vm951 = vcmp.lt.s32.totalorder %v949, 16
            %vm952 = vmand %vm950, %vm951
            %v953 = vsel %vm952, %v947, 0.0
            %v954 = vld [vmem:[%s932] sm:$0xff]
            %955 = vrot.lane.b32.xlu0 %v954, 127
            %v956 = vpop.permute.xlu0 %955
            %v957 = vlaneseq
            %v958 = vand.u32 %v957, 127
            %vm959 = vcmp.eq.s32.totalorder %v958, 15
            %v960 = vsel %vm959, %v936, %v956
            %s961 = smov [#allocation12]
            %s962 = scalar_lea.vmem %s961, 8
            %s963 = smov [#allocation13]
            %s964 = scalar_lea.vmem %s963, 8
            %v965 = vld [vmem:[%s964] sm:$0xff]
            %966 = vrot.lane.b32.xlu0 %v965, 1
            %v967 = vpop.permute.xlu0 %966
            %v968 = vld [vmem:[%s962] sm:$0xff]
            %v969 = vld [vmem:[%s962] sm:$0xff]
            %970 = vrot.lane.b32.xlu0 %v969, 1
            %v971 = vpop.permute.xlu0 %970
            %v972 = vlaneseq
            %v973 = vand.u32 %v972, 127
            %vm974 = vcmp.eq.s32.totalorder %v973, 0
            %v975 = vsel %vm974, %v969, %v971
            %v976 = vlaneseq
            %v977 = vand.u32 %v976, 127
            %vm978 = vcmp.eq.s32.totalorder %v977, 1
            %v979 = vsel %vm978, %v967, %v975
            %v980 = vlaneseq
            %v981 = vand.u32 %v980, 127
            %vm982 = vcmp.ge.s32.totalorder %v981, 0
            %vm983 = vcmp.lt.s32.totalorder %v981, 16
            %vm984 = vmand %vm982, %vm983
            %v985 = vsel %vm984, %v979, 0.0
            %v986 = vld [vmem:[%s964] sm:$0xff]
            %987 = vrot.lane.b32.xlu0 %v986, 127
            %v988 = vpop.permute.xlu0 %987
            %v989 = vlaneseq
            %v990 = vand.u32 %v989, 127
            %vm991 = vcmp.eq.s32.totalorder %v990, 15
            %v992 = vsel %vm991, %v968, %v988
            %993 = vst [vmem:[%s931] sm:$0xff] %v953
            %994 = vst [vmem:[%s932] sm:$0xff] %v960
            %995 = vst [vmem:[%s962] sm:$0xff] %v985
            %996 = vst [vmem:[%s964] sm:$0xff] %v992
            %s997 = smov [#allocation10]
            %s998 = smov [#allocation12]
            %v999 = vld [vmem:[%s997] ss:$0 sm:$0xff]
            %s1001 = scalar_lea.vmem %s997, 4294967295
            %v1002 = vld [vmem:[%s1001] sm:$0xfe]
            %v1003 = vlaneseq
            %v1004 = vshrl.u32 %v1003, 7
            %vm1005 = vcmp.eq.s32.totalorder %v1004, 0
            %v1006 = vsel %vm1005, %v999, %v1002
            %s1007 = scalar_lea.vmem %s997, 7
            %v1008 = vld [vmem:[%s1007] ss:$0 sm:$0xff]
            %1009 = vst [vmem:[%s997] sm:$0xff] %v1006
            %s1010 = scalar_lea.vmem %s997, 8
            %s1012 = scalar_lea.vmem %s1010, 4294967295
            %v1013 = vld [vmem:[%s1012] sm:$0xfe]
            %v1014 = vlaneseq
            %v1015 = vshrl.u32 %v1014, 7
            %vm1016 = vcmp.eq.s32.totalorder %v1015, 0
            %v1017 = vsel %vm1016, %v1008, %v1013
            %s1018 = scalar_lea.vmem %s1010, 7
            %v1019 = vld [vmem:[%s1018] ss:$0 sm:$0xff]
            %1020 = vst [vmem:[%s1010] sm:$0xff] %v1017
            %v1021 = vld [vmem:[%s998] ss:$0 sm:$0xff]
            %s1022 = scalar_lea.vmem %s997, 1
            %1023 = vst [vmem:[%s1022] sm:$0x1] %v1021
            %s1024 = scalar_lea.vmem %s998, 8
            %s1025 = scalar_lea.vmem %s1024, 1
            %v1026 = vld [vmem:[%s1025] sm:$0x7f]
            %v1027 = vlaneseq
            %v1028 = vshrl.u32 %v1027, 7
            %vm1029 = vcmp.eq.s32.totalorder %v1028, 7
            %v1030 = vsel %vm1029, %v1019, %v1026
            %v1031 = vld [vmem:[%s1024] ss:$0 sm:$0xff]
            %1032 = vst [vmem:[%s1024] sm:$0xff] %v1030
            %s1033 = scalar_lea.vmem %s998, 1
            %v1034 = vld [vmem:[%s1033] sm:$0x7f]
            %v1035 = vlaneseq
            %v1036 = vshrl.u32 %v1035, 7
            %vm1037 = vcmp.eq.s32.totalorder %v1036, 7
            %v1038 = vsel %vm1037, %v1031, %v1034
            %v1039 = vld [vmem:[%s998] ss:$0 sm:$0xff]
            %1040 = vst [vmem:[%s998] sm:$0xff] %v1038
            %s1041 = smov [#allocation11]
            %s1042 = smov [#allocation13]
            %v1043 = vld [vmem:[%s1041] ss:$0 sm:$0xff]
            %s1045 = scalar_lea.vmem %s1041, 4294967295
            %v1046 = vld [vmem:[%s1045] sm:$0xfe]
            %v1047 = vlaneseq
            %v1048 = vshrl.u32 %v1047, 7
            %vm1049 = vcmp.eq.s32.totalorder %v1048, 0
            %v1050 = vsel %vm1049, %v1043, %v1046
            %s1051 = scalar_lea.vmem %s1041, 7
            %v1052 = vld [vmem:[%s1051] ss:$0 sm:$0xff]
            %1053 = vst [vmem:[%s1041] sm:$0xff] %v1050
            %s1054 = scalar_lea.vmem %s1041, 8
            %s1056 = scalar_lea.vmem %s1054, 4294967295
            %v1057 = vld [vmem:[%s1056] sm:$0xfe]
            %v1058 = vlaneseq
            %v1059 = vshrl.u32 %v1058, 7
            %vm1060 = vcmp.eq.s32.totalorder %v1059, 0
            %v1061 = vsel %vm1060, %v1052, %v1057
            %s1062 = scalar_lea.vmem %s1054, 7
            %v1063 = vld [vmem:[%s1062] ss:$0 sm:$0xff]
            %1064 = vst [vmem:[%s1054] sm:$0xff] %v1061
            %v1065 = vld [vmem:[%s1042] ss:$0 sm:$0xff]
            %s1066 = scalar_lea.vmem %s1041, 1
            %1067 = vst [vmem:[%s1066] sm:$0x1] %v1065
            %s1068 = scalar_lea.vmem %s1042, 8
            %s1069 = scalar_lea.vmem %s1068, 1
            %v1070 = vld [vmem:[%s1069] sm:$0x7f]
            %v1071 = vlaneseq
            %v1072 = vshrl.u32 %v1071, 7
            %vm1073 = vcmp.eq.s32.totalorder %v1072, 7
            %v1074 = vsel %vm1073, %v1063, %v1070
            %v1075 = vld [vmem:[%s1068] ss:$0 sm:$0xff]
            %1076 = vst [vmem:[%s1068] sm:$0xff] %v1074
            %s1077 = scalar_lea.vmem %s1042, 1
            %v1078 = vld [vmem:[%s1077] sm:$0x7f]
            %v1079 = vlaneseq
            %v1080 = vshrl.u32 %v1079, 7
            %vm1081 = vcmp.eq.s32.totalorder %v1080, 7
            %v1082 = vsel %vm1081, %v1075, %v1078
            %v1083 = vld [vmem:[%s1042] ss:$0 sm:$0xff]
            %1084 = vst [vmem:[%s1042] sm:$0xff] %v1082
            %s1085 = smov [#allocation21]
            %v1086 = vld [vmem:[%s1085] sm:$0xff]
            %s1087 = smov [#allocation22]
            %v1088 = vld [vmem:[%s1087] sm:$0xff]
            %s1089 = smov %s241
            %s1090 = smov %s245
            %s1091 = smov %s249
            %s1092 = smov %s253
            %v1093 = vld [vmem:[%s1089] sm:$0xff]
            %v1094 = vld [vmem:[%s1090] sm:$0xff]
            %v1095 = vld [vmem:[%s1091] sm:$0xff]
            %v1096 = vld [vmem:[%s1092] sm:$0xff]
            %v1097 = vmul.f32 %v1086, %v1093
            %v1098 = vmul.f32 %v1088, %v1095
            %v1099 = vsub.f32 %v1097, %v1098
            %v1100 = vmul.f32 %v1086, %v1094
            %v1101 = vmul.f32 %v1088, %v1096
            %v1102 = vsub.f32 %v1100, %v1101
            %v1103 = vmul.f32 %v1088, %v1093
            %v1104 = vmul.f32 %v1086, %v1095
            %v1105 = vadd.f32 %v1103, %v1104
            %v1106 = vmul.f32 %v1088, %v1094
            %v1107 = vmul.f32 %v1086, %v1096
            %v1108 = vadd.f32 %v1106, %v1107
            %1109 = vst [vmem:[%s1089] sm:$0xff] %v1099
            %1110 = vst [vmem:[%s1090] sm:$0xff] %v1102
            %1111 = vst [vmem:[%s1091] sm:$0xff] %v1105
            %1112 = vst [vmem:[%s1092] sm:$0xff] %v1108
            %s1113 = smov [#allocation21]
            %s1114 = scalar_lea.vmem %s1113, 8
            %v1115 = vld [vmem:[%s1114] sm:$0xff]
            %s1116 = smov [#allocation22]
            %s1117 = scalar_lea.vmem %s1116, 8
            %v1118 = vld [vmem:[%s1117] sm:$0xff]
            %s1119 = smov %s241
            %s1120 = scalar_lea.vmem %s1119, 8
            %s1121 = smov %s245
            %s1122 = scalar_lea.vmem %s1121, 8
            %s1123 = smov %s249
            %s1124 = scalar_lea.vmem %s1123, 8
            %s1125 = smov %s253
            %s1126 = scalar_lea.vmem %s1125, 8
            %v1127 = vld [vmem:[%s1120] sm:$0xff]
            %v1128 = vld [vmem:[%s1122] sm:$0xff]
            %v1129 = vld [vmem:[%s1124] sm:$0xff]
            %v1130 = vld [vmem:[%s1126] sm:$0xff]
            %v1131 = vmul.f32 %v1115, %v1127
            %v1132 = vmul.f32 %v1118, %v1129
            %v1133 = vsub.f32 %v1131, %v1132
            %v1134 = vmul.f32 %v1115, %v1128
            %v1135 = vmul.f32 %v1118, %v1130
            %v1136 = vsub.f32 %v1134, %v1135
            %v1137 = vmul.f32 %v1118, %v1127
            %v1138 = vmul.f32 %v1115, %v1129
            %v1139 = vadd.f32 %v1137, %v1138
            %v1140 = vmul.f32 %v1118, %v1128
            %v1141 = vmul.f32 %v1115, %v1130
            %v1142 = vadd.f32 %v1140, %v1141
            %1143 = vst [vmem:[%s1120] sm:$0xff] %v1133
            %1144 = vst [vmem:[%s1122] sm:$0xff] %v1136
            %1145 = vst [vmem:[%s1124] sm:$0xff] %v1139
            %1146 = vst [vmem:[%s1126] sm:$0xff] %v1142
            %s1147 = smov %s241
            %s1148 = smov %s249
            %v1149 = vld [vmem:[%s1147] ss:$0 sm:$0xff]
            %s1151 = scalar_lea.vmem %s1147, 4294967295
            %v1152 = vld [vmem:[%s1151] sm:$0xfe]
            %v1153 = vlaneseq
            %v1154 = vshrl.u32 %v1153, 7
            %vm1155 = vcmp.eq.s32.totalorder %v1154, 0
            %v1156 = vsel %vm1155, %v1149, %v1152
            %s1157 = scalar_lea.vmem %s1147, 7
            %v1158 = vld [vmem:[%s1157] ss:$0 sm:$0xff]
            %1159 = vst [vmem:[%s1147] sm:$0xff] %v1156
            %s1160 = scalar_lea.vmem %s1147, 8
            %s1162 = scalar_lea.vmem %s1160, 4294967295
            %v1163 = vld [vmem:[%s1162] sm:$0xfe]
            %v1164 = vlaneseq
            %v1165 = vshrl.u32 %v1164, 7
            %vm1166 = vcmp.eq.s32.totalorder %v1165, 0
            %v1167 = vsel %vm1166, %v1158, %v1163
            %s1168 = scalar_lea.vmem %s1160, 7
            %v1169 = vld [vmem:[%s1168] ss:$0 sm:$0xff]
            %1170 = vst [vmem:[%s1160] sm:$0xff] %v1167
            %v1171 = vld [vmem:[%s1148] ss:$0 sm:$0xff]
            %s1172 = scalar_lea.vmem %s1147, 1
            %1173 = vst [vmem:[%s1172] sm:$0x1] %v1171
            %s1174 = scalar_lea.vmem %s1148, 8
            %s1175 = scalar_lea.vmem %s1174, 1
            %v1176 = vld [vmem:[%s1175] sm:$0x7f]
            %v1177 = vlaneseq
            %v1178 = vshrl.u32 %v1177, 7
            %vm1179 = vcmp.eq.s32.totalorder %v1178, 7
            %v1180 = vsel %vm1179, %v1169, %v1176
            %v1181 = vld [vmem:[%s1174] ss:$0 sm:$0xff]
            %1182 = vst [vmem:[%s1174] sm:$0xff] %v1180
            %s1183 = scalar_lea.vmem %s1148, 1
            %v1184 = vld [vmem:[%s1183] sm:$0x7f]
            %v1185 = vlaneseq
            %v1186 = vshrl.u32 %v1185, 7
            %vm1187 = vcmp.eq.s32.totalorder %v1186, 7
            %v1188 = vsel %vm1187, %v1181, %v1184
            %v1189 = vld [vmem:[%s1148] ss:$0 sm:$0xff]
            %1190 = vst [vmem:[%s1148] sm:$0xff] %v1188
            %s1191 = smov %s245
            %s1192 = smov %s253
            %v1193 = vld [vmem:[%s1191] ss:$0 sm:$0xff]
            %s1195 = scalar_lea.vmem %s1191, 4294967295
            %v1196 = vld [vmem:[%s1195] sm:$0xfe]
            %v1197 = vlaneseq
            %v1198 = vshrl.u32 %v1197, 7
            %vm1199 = vcmp.eq.s32.totalorder %v1198, 0
            %v1200 = vsel %vm1199, %v1193, %v1196
            %s1201 = scalar_lea.vmem %s1191, 7
            %v1202 = vld [vmem:[%s1201] ss:$0 sm:$0xff]
            %1203 = vst [vmem:[%s1191] sm:$0xff] %v1200
            %s1204 = scalar_lea.vmem %s1191, 8
            %s1206 = scalar_lea.vmem %s1204, 4294967295
            %v1207 = vld [vmem:[%s1206] sm:$0xfe]
            %v1208 = vlaneseq
            %v1209 = vshrl.u32 %v1208, 7
            %vm1210 = vcmp.eq.s32.totalorder %v1209, 0
            %v1211 = vsel %vm1210, %v1202, %v1207
            %s1212 = scalar_lea.vmem %s1204, 7
            %v1213 = vld [vmem:[%s1212] ss:$0 sm:$0xff]
            %1214 = vst [vmem:[%s1204] sm:$0xff] %v1211
            %v1215 = vld [vmem:[%s1192] ss:$0 sm:$0xff]
            %s1216 = scalar_lea.vmem %s1191, 1
            %1217 = vst [vmem:[%s1216] sm:$0x1] %v1215
            %s1218 = scalar_lea.vmem %s1192, 8
            %s1219 = scalar_lea.vmem %s1218, 1
            %v1220 = vld [vmem:[%s1219] sm:$0x7f]
            %v1221 = vlaneseq
            %v1222 = vshrl.u32 %v1221, 7
            %vm1223 = vcmp.eq.s32.totalorder %v1222, 7
            %v1224 = vsel %vm1223, %v1213, %v1220
            %v1225 = vld [vmem:[%s1218] ss:$0 sm:$0xff]
            %1226 = vst [vmem:[%s1218] sm:$0xff] %v1224
            %s1227 = scalar_lea.vmem %s1192, 1
            %v1228 = vld [vmem:[%s1227] sm:$0x7f]
            %v1229 = vlaneseq
            %v1230 = vshrl.u32 %v1229, 7
            %vm1231 = vcmp.eq.s32.totalorder %v1230, 7
            %v1232 = vsel %vm1231, %v1225, %v1228
            %v1233 = vld [vmem:[%s1192] ss:$0 sm:$0xff]
            %1234 = vst [vmem:[%s1192] sm:$0xff] %v1232
          $region108: #{custom-call.2} parent=100 // loop_footer
            %s471 = sadd.s32 1, %s467
          $region109: #{custom-call.2} parent=100 // loop_footer_branch
            %466 = sbr.rel target = $region105
          $region110: #{custom-call.2} parent=100 // loop_exit
            _
          %s1235 = sadd.s32 %s337, 1
        $region101: #{custom-call.2} parent=95 // loop_footer
          _
        $region102: #{custom-call.2} parent=95 // loop_footer_branch
          %336 = sbr.rel target = $region98
        $region103: #{custom-call.2} parent=95 // loop_exit
          _
        %s1238 = sand.u32 %s17, 7
        %s1239 = scalar_lea.vmem %s231, %s1238 [#allocation4]
        %s1240 = sand.u32 %s17, 7
        %s1241 = scalar_lea.vmem %s237, %s1240 [#allocation5]
        %s1242 = smov [#allocation10]
        %s1243 = smov %s1239
        %v1244 = vlaneseq
        %v1245 = vand.u32 %v1244, 127
        %v1246 = vmov %v1245
        %v1247 = vlaneseq
        %v1248 = vshrl.u32 %v1247, 7
        %v1249 = vmov %v1248
        %v1250 = vld [vmem:[%s1242] sm:$0xff]
        %vm1253 = vcmp.eq.s32.totalorder %v1249, %v1246
        %v1254 = vsel %vm1253, %v1250, 0.0
        %s1255 = scalar_lea.vmem %s1242, 8
        %v1256 = vld [vmem:[%s1255] sm:$0xff]
        %v1258 = vadd.s32 %v1249, 8
        %vm1259 = vcmp.eq.s32.totalorder %v1258, %v1246
        %v1260 = vsel %vm1259, %v1256, %v1254
        %v1261 = vrot.slane %v1260, 4
        %v1262 = vadd.f32 %v1260, %v1261
        %v1263 = vrot.slane %v1262, 2
        %v1264 = vadd.f32 %v1262, %v1263
        %v1265 = vrot.slane %v1264, 1
        %v1266 = vadd.f32 %v1264, %v1265
        %1267 = vst [vmem:[%s1243] sm:$0x1] %v1266
        %s1268 = smov [#allocation13]
        %s1269 = smov %s1241
        %v1270 = vlaneseq
        %v1271 = vand.u32 %v1270, 127
        %v1272 = vmov %v1271
        %v1273 = vlaneseq
        %v1274 = vshrl.u32 %v1273, 7
        %v1275 = vmov %v1274
        %v1276 = vld [vmem:[%s1268] sm:$0xff]
        %vm1279 = vcmp.eq.s32.totalorder %v1275, %v1272
        %v1280 = vsel %vm1279, %v1276, 0.0
        %s1281 = scalar_lea.vmem %s1268, 8
        %v1282 = vld [vmem:[%s1281] sm:$0xff]
        %v1284 = vadd.s32 %v1275, 8
        %vm1285 = vcmp.eq.s32.totalorder %v1284, %v1272
        %v1286 = vsel %vm1285, %v1282, %v1280
        %v1287 = vrot.slane %v1286, 4
        %v1288 = vadd.f32 %v1286, %v1287
        %v1289 = vrot.slane %v1288, 2
        %v1290 = vadd.f32 %v1288, %v1289
        %v1291 = vrot.slane %v1290, 1
        %v1292 = vadd.f32 %v1290, %v1291
        %1293 = vst [vmem:[%s1269] sm:$0x1] %v1292
        %s1294 = sand.u32 %s27, 1
        %s1295 = sand.u32 %s27, 1
        %s1296 = smul.addr %s1295, 8
        %s1297 = scalar_lea.vmem [#allocation4], %s1296
        %s1298 = sand.u32 %s55, 1
        %s1299 = sand.u32 %s55, 1
        %s1300 = smul.addr %s1299, 8
        %s1301 = scalar_lea.vmem [#allocation5], %s1300
        %s1302 = sand.u32 %s17, 1
        %s1303 = sand.u32 %s17, 1
        %s1304 = smul.addr %s1303, 16
        %s1305 = scalar_lea.vmem [#allocation6], %s1304
        %s1306 = sand.u32 %s17, 1
        %s1307 = sand.u32 %s17, 1
        %s1308 = smul.addr %s1307, 16
        %s1309 = scalar_lea.vmem [#allocation7], %s1308
        %s1310 = sand.u32 %s17, 1
        %s1311 = sand.u32 %s17, 1
        %s1312 = smul.addr %s1311, 16
        %s1313 = scalar_lea.vmem [#allocation8], %s1312
        %s1314 = sand.u32 %s17, 1
        %s1315 = sand.u32 %s17, 1
        %s1316 = smul.addr %s1315, 16
        %s1317 = scalar_lea.vmem [#allocation9], %s1316
        // Predicated region
        $region111: #{custom-call.2} parent=95 // pred_check
          %p1318 = pneg %p37
        $region112: #{custom-call.2} parent=95 // pred_check_branch
          %1320 = sbr.rel (%p1318) target = $region114
        $region113: #{custom-call.2} parent=95 // pred_region
          %s1321 = sshrl.u32 %s17, 3
          %s1322 = smul.addr %s1321, 8
          %s1323 = scalar_lea.vmem %s4, %s1322
          // Predicated region
          $region115: #{custom-call.2} parent=113 // pred_check
            _
          $region116: #{custom-call.2} parent=113 // pred_check_branch
            %1325 = sbr.rel (0) target = $region118
          $region117: #{custom-call.2} parent=113 // pred_region
            // Predicated region
            $region119: #{custom-call.2} parent=117 // pred_check
              _
            $region120: #{custom-call.2} parent=117 // pred_check_branch
              %1327 = sbr.rel (0) target = $region122
            $region121: #{custom-call.2} parent=117 // pred_region
              // Predicated region
              $region134: #{custom-call.2} parent=121 // pred_check
                _
              $region135: #{custom-call.2} parent=121 // pred_check_branch
                %1343 = sbr.rel (0) target = $region137
              $region136: #{custom-call.2} parent=121 // pred_region
                loop: start=0, step=1, limit=1
                $region138: #{custom-call.2} parent=136 // loop_pre_header
                  _
                $region139: #{custom-call.2} parent=136 // loop_header
                  %s1345 = sphi 0, %s1349
                  %p1346 = scmp.ge.s32.totalorder %s1345, 1
                  %s1350 = sphi %s1297, %s1297
                  %s1351 = sphi %s1323, %s1323
                $region140: #{custom-call.2} parent=136 // loop_header_branch
                  %1348 = sbr.rel (%p1346) target = $region144
                $region141: #{custom-call.2} parent=136 // loop_body
                  %v1352 = vld [vmem:[%s1350] sm:$0xff]
                  %1353 = vst [vmem:[%s1351] sm:$0xff] %v1352
                $region142: #{custom-call.2} parent=136 // loop_footer
                  %s1349 = sadd.s32 1, %s1345
                $region143: #{custom-call.2} parent=136 // loop_footer_branch
                  %1344 = sbr.rel target = $region139
                $region144: #{custom-call.2} parent=136 // loop_exit
                  _
              $region137: #{custom-call.2} parent=121 // pred_fallthru
                _
              // Predicated region
              $region145: #{custom-call.2} parent=121 // pred_check
                _
              $region146: #{custom-call.2} parent=121 // pred_check_branch
                %1355 = sbr.rel target = $region148
              $region147: #{custom-call.2} parent=121 // pred_region
                _
              $region148: #{custom-call.2} parent=121 // pred_fallthru
                _
            $region122: #{custom-call.2} parent=117 // pred_fallthru
              _
            // Predicated region
            $region123: #{custom-call.2} parent=117 // pred_check
              _
            $region124: #{custom-call.2} parent=117 // pred_check_branch
              %1329 = sbr.rel target = $region126
            $region125: #{custom-call.2} parent=117 // pred_region
              %s1331 = ssub.s32 256, 1
              loop: start=0, step=1, limit=1
              $region127: #{custom-call.2} parent=125 // loop_pre_header
                _
              $region128: #{custom-call.2} parent=125 // loop_header
                %s1333 = sphi 0, %s1337
                %p1334 = scmp.ge.s32.totalorder %s1333, 1
                %s1338 = sphi %s1297, %s1297
                %s1339 = sphi %s1323, %s1323
              $region129: #{custom-call.2} parent=125 // loop_header_branch
                %1336 = sbr.rel (%p1334) target = $region133
              $region130: #{custom-call.2} parent=125 // loop_body
                %v1340 = vld [vmem:[%s1338] sm:%s1331]
                %1341 = vst [vmem:[%s1339] sm:%s1331] %v1340
              $region131: #{custom-call.2} parent=125 // loop_footer
                %s1337 = sadd.s32 1, %s1333
              $region132: #{custom-call.2} parent=125 // loop_footer_branch
                %1332 = sbr.rel target = $region128
              $region133: #{custom-call.2} parent=125 // loop_exit
                _
            $region126: #{custom-call.2} parent=117 // pred_fallthru
              _
          $region118: #{custom-call.2} parent=113 // pred_fallthru
            _
          %1356 = vnop
        $region114: #{custom-call.2} parent=95 // pred_fallthru
          _
        // Predicated region
        $region149: #{custom-call.2} parent=95 // pred_check
          %p1357 = pneg %p65
        $region150: #{custom-call.2} parent=95 // pred_check_branch
          %1359 = sbr.rel (%p1357) target = $region152
        $region151: #{custom-call.2} parent=95 // pred_region
          %s1360 = sshrl.u32 %s17, 3
          %s1361 = smul.addr %s1360, 8
          %s1362 = scalar_lea.vmem %s5, %s1361
          // Predicated region
          $region153: #{custom-call.2} parent=151 // pred_check
            _
          $region154: #{custom-call.2} parent=151 // pred_check_branch
            %1364 = sbr.rel (0) target = $region156
          $region155: #{custom-call.2} parent=151 // pred_region
            // Predicated region
            $region157: #{custom-call.2} parent=155 // pred_check
              _
            $region158: #{custom-call.2} parent=155 // pred_check_branch
              %1366 = sbr.rel (0) target = $region160
            $region159: #{custom-call.2} parent=155 // pred_region
              // Predicated region
              $region172: #{custom-call.2} parent=159 // pred_check
                _
              $region173: #{custom-call.2} parent=159 // pred_check_branch
                %1382 = sbr.rel (0) target = $region175
              $region174: #{custom-call.2} parent=159 // pred_region
                loop: start=0, step=1, limit=1
                $region176: #{custom-call.2} parent=174 // loop_pre_header
                  _
                $region177: #{custom-call.2} parent=174 // loop_header
                  %s1384 = sphi 0, %s1388
                  %p1385 = scmp.ge.s32.totalorder %s1384, 1
                  %s1389 = sphi %s1301, %s1301
                  %s1390 = sphi %s1362, %s1362
                $region178: #{custom-call.2} parent=174 // loop_header_branch
                  %1387 = sbr.rel (%p1385) target = $region182
                $region179: #{custom-call.2} parent=174 // loop_body
                  %v1391 = vld [vmem:[%s1389] sm:$0xff]
                  %1392 = vst [vmem:[%s1390] sm:$0xff] %v1391
                $region180: #{custom-call.2} parent=174 // loop_footer
                  %s1388 = sadd.s32 1, %s1384
                $region181: #{custom-call.2} parent=174 // loop_footer_branch
                  %1383 = sbr.rel target = $region177
                $region182: #{custom-call.2} parent=174 // loop_exit
                  _
              $region175: #{custom-call.2} parent=159 // pred_fallthru
                _
              // Predicated region
              $region183: #{custom-call.2} parent=159 // pred_check
                _
              $region184: #{custom-call.2} parent=159 // pred_check_branch
                %1394 = sbr.rel target = $region186
              $region185: #{custom-call.2} parent=159 // pred_region
                _
              $region186: #{custom-call.2} parent=159 // pred_fallthru
                _
            $region160: #{custom-call.2} parent=155 // pred_fallthru
              _
            // Predicated region
            $region161: #{custom-call.2} parent=155 // pred_check
              _
            $region162: #{custom-call.2} parent=155 // pred_check_branch
              %1368 = sbr.rel target = $region164
            $region163: #{custom-call.2} parent=155 // pred_region
              %s1370 = ssub.s32 256, 1
              loop: start=0, step=1, limit=1
              $region165: #{custom-call.2} parent=163 // loop_pre_header
                _
              $region166: #{custom-call.2} parent=163 // loop_header
                %s1372 = sphi 0, %s1376
                %p1373 = scmp.ge.s32.totalorder %s1372, 1
                %s1377 = sphi %s1301, %s1301
                %s1378 = sphi %s1362, %s1362
              $region167: #{custom-call.2} parent=163 // loop_header_branch
                %1375 = sbr.rel (%p1373) target = $region171
              $region168: #{custom-call.2} parent=163 // loop_body
                %v1379 = vld [vmem:[%s1377] sm:%s1370]
                %1380 = vst [vmem:[%s1378] sm:%s1370] %v1379
              $region169: #{custom-call.2} parent=163 // loop_footer
                %s1376 = sadd.s32 1, %s1372
              $region170: #{custom-call.2} parent=163 // loop_footer_branch
                %1371 = sbr.rel target = $region166
              $region171: #{custom-call.2} parent=163 // loop_exit
                _
            $region164: #{custom-call.2} parent=155 // pred_fallthru
              _
          $region156: #{custom-call.2} parent=151 // pred_fallthru
            _
          %1395 = vnop
        $region152: #{custom-call.2} parent=95 // pred_fallthru
          _
        %s1396 = smul.addr %s17, 16
        %s1397 = scalar_lea.vmem %s6, %s1396
        // Predicated region
        $region187: #{custom-call.2} parent=95 // pred_check
          _
        $region188: #{custom-call.2} parent=95 // pred_check_branch
          %1399 = sbr.rel (0) target = $region190
        $region189: #{custom-call.2} parent=95 // pred_region
          // Predicated region
          $region191: #{custom-call.2} parent=189 // pred_check
            _
          $region192: #{custom-call.2} parent=189 // pred_check_branch
            %1401 = sbr.rel (0) target = $region194
          $region193: #{custom-call.2} parent=189 // pred_region
            loop: start=0, step=1, limit=1
            $region195: #{custom-call.2} parent=193 // loop_pre_header
              _
            $region196: #{custom-call.2} parent=193 // loop_header
              %s1403 = sphi 0, %s1407
              %p1404 = scmp.ge.s32.totalorder %s1403, 1
              %s1408 = sphi %s1305, %s1305
              %s1409 = sphi %s1397, %s1397
            $region197: #{custom-call.2} parent=193 // loop_header_branch
              %1406 = sbr.rel (%p1404) target = $region201
            $region198: #{custom-call.2} parent=193 // loop_body
              %v1410 = vld [vmem:[%s1408] sm:$0xff]
              %1411 = vst [vmem:[%s1409] sm:$0xff] %v1410
              %v1412 = vld [vmem:[%s1408 + $0x8] sm:$0xff]
              %1413 = vst [vmem:[%s1409 + $0x8] sm:$0xff] %v1412
            $region199: #{custom-call.2} parent=193 // loop_footer
              %s1407 = sadd.s32 1, %s1403
            $region200: #{custom-call.2} parent=193 // loop_footer_branch
              %1402 = sbr.rel target = $region196
            $region201: #{custom-call.2} parent=193 // loop_exit
              _
          $region194: #{custom-call.2} parent=189 // pred_fallthru
            _
          // Predicated region
          $region202: #{custom-call.2} parent=189 // pred_check
            _
          $region203: #{custom-call.2} parent=189 // pred_check_branch
            %1415 = sbr.rel target = $region205
          $region204: #{custom-call.2} parent=189 // pred_region
            _
          $region205: #{custom-call.2} parent=189 // pred_fallthru
            _
        $region190: #{custom-call.2} parent=95 // pred_fallthru
          _
        %1416 = vnop
        %s1417 = smul.addr %s17, 16
        %s1418 = scalar_lea.vmem %s7, %s1417
        // Predicated region
        $region206: #{custom-call.2} parent=95 // pred_check
          _
        $region207: #{custom-call.2} parent=95 // pred_check_branch
          %1420 = sbr.rel (0) target = $region209
        $region208: #{custom-call.2} parent=95 // pred_region
          // Predicated region
          $region210: #{custom-call.2} parent=208 // pred_check
            _
          $region211: #{custom-call.2} parent=208 // pred_check_branch
            %1422 = sbr.rel (0) target = $region213
          $region212: #{custom-call.2} parent=208 // pred_region
            loop: start=0, step=1, limit=1
            $region214: #{custom-call.2} parent=212 // loop_pre_header
              _
            $region215: #{custom-call.2} parent=212 // loop_header
              %s1424 = sphi 0, %s1428
              %p1425 = scmp.ge.s32.totalorder %s1424, 1
              %s1429 = sphi %s1309, %s1309
              %s1430 = sphi %s1418, %s1418
            $region216: #{custom-call.2} parent=212 // loop_header_branch
              %1427 = sbr.rel (%p1425) target = $region220
            $region217: #{custom-call.2} parent=212 // loop_body
              %v1431 = vld [vmem:[%s1429] sm:$0xff]
              %1432 = vst [vmem:[%s1430] sm:$0xff] %v1431
              %v1433 = vld [vmem:[%s1429 + $0x8] sm:$0xff]
              %1434 = vst [vmem:[%s1430 + $0x8] sm:$0xff] %v1433
            $region218: #{custom-call.2} parent=212 // loop_footer
              %s1428 = sadd.s32 1, %s1424
            $region219: #{custom-call.2} parent=212 // loop_footer_branch
              %1423 = sbr.rel target = $region215
            $region220: #{custom-call.2} parent=212 // loop_exit
              _
          $region213: #{custom-call.2} parent=208 // pred_fallthru
            _
          // Predicated region
          $region221: #{custom-call.2} parent=208 // pred_check
            _
          $region222: #{custom-call.2} parent=208 // pred_check_branch
            %1436 = sbr.rel target = $region224
          $region223: #{custom-call.2} parent=208 // pred_region
            _
          $region224: #{custom-call.2} parent=208 // pred_fallthru
            _
        $region209: #{custom-call.2} parent=95 // pred_fallthru
          _
        %1437 = vnop
        %s1438 = smul.addr %s17, 16
        %s1439 = scalar_lea.vmem %s8, %s1438
        // Predicated region
        $region225: #{custom-call.2} parent=95 // pred_check
          _
        $region226: #{custom-call.2} parent=95 // pred_check_branch
          %1441 = sbr.rel (0) target = $region228
        $region227: #{custom-call.2} parent=95 // pred_region
          // Predicated region
          $region229: #{custom-call.2} parent=227 // pred_check
            _
          $region230: #{custom-call.2} parent=227 // pred_check_branch
            %1443 = sbr.rel (0) target = $region232
          $region231: #{custom-call.2} parent=227 // pred_region
            loop: start=0, step=1, limit=1
            $region233: #{custom-call.2} parent=231 // loop_pre_header
              _
            $region234: #{custom-call.2} parent=231 // loop_header
              %s1445 = sphi 0, %s1449
              %p1446 = scmp.ge.s32.totalorder %s1445, 1
              %s1450 = sphi %s1313, %s1313
              %s1451 = sphi %s1439, %s1439
            $region235: #{custom-call.2} parent=231 // loop_header_branch
              %1448 = sbr.rel (%p1446) target = $region239
            $region236: #{custom-call.2} parent=231 // loop_body
              %v1452 = vld [vmem:[%s1450] sm:$0xff]
              %1453 = vst [vmem:[%s1451] sm:$0xff] %v1452
              %v1454 = vld [vmem:[%s1450 + $0x8] sm:$0xff]
              %1455 = vst [vmem:[%s1451 + $0x8] sm:$0xff] %v1454
            $region237: #{custom-call.2} parent=231 // loop_footer
              %s1449 = sadd.s32 1, %s1445
            $region238: #{custom-call.2} parent=231 // loop_footer_branch
              %1444 = sbr.rel target = $region234
            $region239: #{custom-call.2} parent=231 // loop_exit
              _
          $region232: #{custom-call.2} parent=227 // pred_fallthru
            _
          // Predicated region
          $region240: #{custom-call.2} parent=227 // pred_check
            _
          $region241: #{custom-call.2} parent=227 // pred_check_branch
            %1457 = sbr.rel target = $region243
          $region242: #{custom-call.2} parent=227 // pred_region
            _
          $region243: #{custom-call.2} parent=227 // pred_fallthru
            _
        $region228: #{custom-call.2} parent=95 // pred_fallthru
          _
        %1458 = vnop
        %s1459 = smul.addr %s17, 16
        %s1460 = scalar_lea.vmem %s9, %s1459
        // Predicated region
        $region244: #{custom-call.2} parent=95 // pred_check
          _
        $region245: #{custom-call.2} parent=95 // pred_check_branch
          %1462 = sbr.rel (0) target = $region247
        $region246: #{custom-call.2} parent=95 // pred_region
          // Predicated region
          $region248: #{custom-call.2} parent=246 // pred_check
            _
          $region249: #{custom-call.2} parent=246 // pred_check_branch
            %1464 = sbr.rel (0) target = $region251
          $region250: #{custom-call.2} parent=246 // pred_region
            loop: start=0, step=1, limit=1
            $region252: #{custom-call.2} parent=250 // loop_pre_header
              _
            $region253: #{custom-call.2} parent=250 // loop_header
              %s1466 = sphi 0, %s1470
              %p1467 = scmp.ge.s32.totalorder %s1466, 1
              %s1471 = sphi %s1317, %s1317
              %s1472 = sphi %s1460, %s1460
            $region254: #{custom-call.2} parent=250 // loop_header_branch
              %1469 = sbr.rel (%p1467) target = $region258
            $region255: #{custom-call.2} parent=250 // loop_body
              %v1473 = vld [vmem:[%s1471] sm:$0xff]
              %1474 = vst [vmem:[%s1472] sm:$0xff] %v1473
              %v1475 = vld [vmem:[%s1471 + $0x8] sm:$0xff]
              %1476 = vst [vmem:[%s1472 + $0x8] sm:$0xff] %v1475
            $region256: #{custom-call.2} parent=250 // loop_footer
              %s1470 = sadd.s32 1, %s1466
            $region257: #{custom-call.2} parent=250 // loop_footer_branch
              %1465 = sbr.rel target = $region253
            $region258: #{custom-call.2} parent=250 // loop_exit
              _
          $region251: #{custom-call.2} parent=246 // pred_fallthru
            _
          // Predicated region
          $region259: #{custom-call.2} parent=246 // pred_check
            _
          $region260: #{custom-call.2} parent=246 // pred_check_branch
            %1478 = sbr.rel target = $region262
          $region261: #{custom-call.2} parent=246 // pred_region
            _
          $region262: #{custom-call.2} parent=246 // pred_fallthru
            _
        $region247: #{custom-call.2} parent=95 // pred_fallthru
          _
        %1479 = vnop
      $region96: #{custom-call.2} parent=5 // pred_fallthru
        _
      %p1480 = scmp.le.s32.totalorder 2, %s12
      // Predicated region
      $region263: #{custom-call.2} parent=5 // pred_check
        %p1481 = pneg %p1480
      $region264: #{custom-call.2} parent=5 // pred_check_branch
        %1483 = sbr.rel (%p1481) target = $region266
      $region265: #{custom-call.2} parent=5 // pred_region
        %s1484 = ssub.s32 %s12, 2
        // Predicated region
        $region267: #{custom-call.2} parent=265 // pred_check
          %p1485 = pneg %p43
        $region268: #{custom-call.2} parent=265 // pred_check_branch
          %1487 = sbr.rel (%p1485) target = $region270
        $region269: #{custom-call.2} parent=265 // pred_region
          %s1488 = sand.u32 %s28, 1
          %s1489 = sand.u32 %s28, 1
          %s1490 = smul.addr %s1489, 8
          %s1491 = scalar_lea.vmem [#allocation4], %s1490
        $region270: #{custom-call.2} parent=265 // pred_fallthru
          _
        // Predicated region
        $region271: #{custom-call.2} parent=265 // pred_check
          %p1492 = pneg %p71
        $region272: #{custom-call.2} parent=265 // pred_check_branch
          %1494 = sbr.rel (%p1492) target = $region274
        $region273: #{custom-call.2} parent=265 // pred_region
          %s1495 = sand.u32 %s56, 1
          %s1496 = sand.u32 %s56, 1
          %s1497 = smul.addr %s1496, 8
          %s1498 = scalar_lea.vmem [#allocation5], %s1497
        $region274: #{custom-call.2} parent=265 // pred_fallthru
          _
        %s1499 = sand.u32 %s18, 1
        %s1500 = sand.u32 %s18, 1
        %s1501 = smul.addr %s1500, 16
        %s1502 = scalar_lea.vmem [#allocation6], %s1501
        %s1503 = sand.u32 %s18, 1
        %s1504 = sand.u32 %s18, 1
        %s1505 = smul.addr %s1504, 16
        %s1506 = scalar_lea.vmem [#allocation7], %s1505
        %s1507 = sand.u32 %s18, 1
        %s1508 = sand.u32 %s18, 1
        %s1509 = smul.addr %s1508, 16
        %s1510 = scalar_lea.vmem [#allocation8], %s1509
        %s1511 = sand.u32 %s18, 1
        %s1512 = sand.u32 %s18, 1
        %s1513 = smul.addr %s1512, 16
        %s1514 = scalar_lea.vmem [#allocation9], %s1513
      $region266: #{custom-call.2} parent=5 // pred_fallthru
        _
    $region6: #{custom-call.2} parent=1 // loop_footer
      %s16 = sadd.s32 1, %s12
    $region7: #{custom-call.2} parent=1 // loop_footer_branch
      %11 = sbr.rel target = $region3
    $region8: #{custom-call.2} parent=1 // loop_exit
      _

// kernel: reeig_forward.1
$region0: #{reeig_forward.1}
  #allocation0 [shape = 'u32[]', space=smem, size = 0x4, offset = 0x4, fixed_abs, tag = 'smem constant byte address 0x4 - core index']
  #allocation1 [shape = 'u32[144,128]{1,0:T(1,128)}', space=vmem, size = 0x12000, scoped, tag = 'internal scratch']
  %s0 = inlined_call_operand.vmem [shape: f32[16,1,32], index: 0, kind: input, shape index: {}]
  %s1 = inlined_call_operand.hbm [shape: f32[16,32,32], index: 1, kind: input, shape index: {}, may-alias: {1,2}]
  %s2 = inlined_call_operand.hbm [shape: f32[16,32,32], index: 2, kind: output, shape index: {}, may-alias: {1,2}]
  %s3 = sld [smem:[#allocation0]]
  $region45: #{reeig_forward.1} parent=0
    _
  %s5 = ssub.s32 1, %s3
  %s6 = scalar_select 0, %s5, %s3
  $region1: #{reeig_forward.1} parent=0
    #allocation2 [shape = 'u8[131072]{0}', space=vmem, size = 0x20000, scoped, tag = 'input window, operand 1']
    #allocation3 [shape = 's32[2]{0}', space=sflag, size = 0x8, scoped, tag = 'scoped memory for reeig_forward.1']
    #allocation4 [shape = 's32[2]{0}', space=sflag, size = 0x8, scoped, tag = 'scoped memory for reeig_forward.1']
    #allocation5 [shape = 'u8[131072]{0}', space=vmem, size = 0x20000, scoped, tag = 'output window, operand 0']
    %7 = vsyncpa [#allocation3], 0
    %s8 = scalar_lea.sflag [#allocation3], 1
    %9 = vsyncpa %s8, 0
    %10 = vsyncpa [#allocation4], 0
    %s11 = scalar_lea.sflag [#allocation4], 1
    %12 = vsyncpa %s11, 0
    loop: start=0, step=1, limit=6
    $region2: #{reeig_forward.1} parent=1 // loop_pre_header
      _
    $region3: #{reeig_forward.1} parent=1 // loop_header
      %s14 = sphi 0, %s18
      %p15 = scmp.ge.s32.totalorder %s14, 6
      %s24 = sphi 0, %s26
      %s27 = sphi 0, %s24
      %s28 = sphi 0, %s27
      %s44 = sphi 0, %s28
      %s50 = sphi 0, %s52
      %s53 = sphi 0, %s50
      %s54 = sphi 0, %s53
      %s70 = sphi 0, %s54
      %s76 = sphi 0, %s78
      %s79 = sphi 0, %s76
      %s80 = sphi 0, %s79
      %s96 = sphi 0, %s80
    $region4: #{reeig_forward.1} parent=1 // loop_header_branch
      %17 = sbr.rel (%p15) target = $region8
    $region5: #{reeig_forward.1} parent=1 // loop_body
      %s19 = ssub.s32 %s14, 1
      %s20 = ssub.s32 %s14, 2
      %s21 = sadd.s32 %s14, 1
      %s22 = ssub.s32 %s14, %s21
      %p23 = scmp.eq.s32.totalorder %s22, 0
      %s25 = sadd.s32 %s24, 1
      %s26 = scalar_select %p23, %s24, %s25
      %p29 = pneg %p23
      %p30 = scmp.eq.s32.totalorder %s14, 3
      %p31 = por %p29, %p30
      %p32 = scmp.ne.s32.totalorder %s24, %s27
      %p33 = scmp.eq.s32.totalorder %s14, 0
      %p34 = por %p32, %p33
      %p35 = scmp.ne.s32.totalorder %s24, %s27
      %p36 = scmp.eq.s32.totalorder %s19, 3
      %p37 = por %p35, %p36
      %p38 = scmp.ne.s32.totalorder %s27, %s28
      %p39 = scmp.eq.s32.totalorder %s19, 0
      %p40 = por %p38, %p39
      %p41 = scmp.ne.s32.totalorder %s27, %s28
      %p42 = scmp.eq.s32.totalorder %s20, 3
      %p43 = por %p41, %p42
      %p45 = scmp.ne.s32.totalorder %s28, %s44
      %p46 = scmp.eq.s32.totalorder %s20, 0
      %p47 = por %p45, %p46
      %s48 = ssub.s32 %s14, %s21
      %p49 = scmp.eq.s32.totalorder %s48, 0
      %s51 = sadd.s32 %s50, 1
      %s52 = scalar_select %p49, %s50, %s51
      %p55 = pneg %p49
      %p56 = scmp.eq.s32.totalorder %s14, 3
      %p57 = por %p55, %p56
      %p58 = scmp.ne.s32.totalorder %s50, %s53
      %p59 = scmp.eq.s32.totalorder %s14, 0
      %p60 = por %p58, %p59
      %p61 = scmp.ne.s32.totalorder %s50, %s53
      %p62 = scmp.eq.s32.totalorder %s19, 3
      %p63 = por %p61, %p62
      %p64 = scmp.ne.s32.totalorder %s53, %s54
      %p65 = scmp.eq.s32.totalorder %s19, 0
      %p66 = por %p64, %p65
      %p67 = scmp.ne.s32.totalorder %s53, %s54
      %p68 = scmp.eq.s32.totalorder %s20, 3
      %p69 = por %p67, %p68
      %p71 = scmp.ne.s32.totalorder %s54, %s70
      %p72 = scmp.eq.s32.totalorder %s20, 0
      %p73 = por %p71, %p72
      %s74 = ssub.s32 %s14, %s21
      %p75 = scmp.eq.s32.totalorder %s74, 0
      %s77 = sadd.s32 %s76, 1
      %s78 = scalar_select %p75, %s76, %s77
      %p81 = pneg %p75
      %p82 = scmp.eq.s32.totalorder %s14, 3
      %p83 = por %p81, %p82
      %p84 = scmp.ne.s32.totalorder %s76, %s79
      %p85 = scmp.eq.s32.totalorder %s14, 0
      %p86 = por %p84, %p85
      %p87 = scmp.ne.s32.totalorder %s76, %s79
      %p88 = scmp.eq.s32.totalorder %s19, 3
      %p89 = por %p87, %p88
      %p90 = scmp.ne.s32.totalorder %s79, %s80
      %p91 = scmp.eq.s32.totalorder %s19, 0
      %p92 = por %p90, %p91
      %p93 = scmp.ne.s32.totalorder %s79, %s80
      %p94 = scmp.eq.s32.totalorder %s20, 3
      %p95 = por %p93, %p94
      %p97 = scmp.ne.s32.totalorder %s80, %s96
      %p98 = scmp.eq.s32.totalorder %s20, 0
      %p99 = por %p97, %p98
      %p100 = scmp.le.s32.totalorder 1, %s14
      %p101 = scmp.lt.s32.totalorder %s14, 5
      %p102 = pnand %p100, %p101
      %p103 = pneg %p102
      // Predicated region
      $region9: #{reeig_forward.1} parent=5 // pred_check
        _
      $region10: #{reeig_forward.1} parent=5 // pred_check_branch
        %105 = sbr.rel (%p102) target = $region12
      $region11: #{reeig_forward.1} parent=5 // pred_region
        %s106 = ssub.s32 %s14, 1
      $region12: #{reeig_forward.1} parent=5 // pred_fallthru
        _
      %p107 = scmp.lt.s32.totalorder %s14, 4
      // Predicated region
      $region13: #{reeig_forward.1} parent=5 // pred_check
        %p108 = pneg %p107
      $region14: #{reeig_forward.1} parent=5 // pred_check_branch
        %110 = sbr.rel (%p108) target = $region16
      $region15: #{reeig_forward.1} parent=5 // pred_region
        // Predicated region
        $region17: #{reeig_forward.1} parent=15 // pred_check
          %p111 = pneg %p34
        $region18: #{reeig_forward.1} parent=15 // pred_check_branch
          %113 = sbr.rel (%p111) target = $region20
        $region19: #{reeig_forward.1} parent=15 // pred_region
          %s114 = smul.u32 4, %s14
          %p115 = scmp.lt.s32.totalorder %s114, 15
          %s116 = scalar_select %p115, %s114, 15
          %s117 = scalar_lea.vmem %s0, %s116
          %s118 = smul.u32 4, %s14
        $region20: #{reeig_forward.1} parent=15 // pred_fallthru
          _
        // Predicated region
        $region21: #{reeig_forward.1} parent=15 // pred_check
          %p119 = pneg %p60
        $region22: #{reeig_forward.1} parent=15 // pred_check_branch
          %121 = sbr.rel (%p119) target = $region24
        $region23: #{reeig_forward.1} parent=15 // pred_region
          %s122 = sand.u32 %s50, 1
          %s123 = scalar_lea.sflag [#allocation3], %s122
          %s124 = sand.u32 %s50, 1
          %s125 = smul.addr %s124, 128
          %s126 = scalar_lea.vmem [#allocation2], %s125
          %s127 = smul.u32 4, %s14
          %s129 = ssub.s32 2048, 2048
          %130 = vsyncadd %s123, %s129
          %s131 = smul.addr %s127, 4
          %s132 = smul.addr %s131, 128
          %s133 = scalar_lea.hbm %s1, %s132
          %s134 = sshll.u32 %s126, 4
          %s135 = int_to_ptr.vmem [resolvable:$true] %s134
          %140 = dma.hbm_to_vmem [thread:$0]  %s133, 2048, %s135, %s123, 128, 128, 8
        $region24: #{reeig_forward.1} parent=15 // pred_fallthru
          _
      $region16: #{reeig_forward.1} parent=5 // pred_fallthru
        _
      %p141 = scmp.le.s32.totalorder 1, %s14
      %p142 = scmp.lt.s32.totalorder %s14, 5
      %p143 = pnand %p141, %p142
      %p144 = pneg %p143
      // Predicated region
      $region25: #{reeig_forward.1} parent=5 // pred_check
        _
      $region26: #{reeig_forward.1} parent=5 // pred_check_branch
        %146 = sbr.rel (%p143) target = $region28
      $region27: #{reeig_forward.1} parent=5 // pred_region
        %s147 = ssub.s32 %s14, 1
        %s148 = sand.u32 %s53, 1
        %s149 = scalar_lea.sflag [#allocation3], %s148
        %s150 = sand.u32 %s53, 1
        %s151 = smul.addr %s150, 128
        %s152 = scalar_lea.vmem [#allocation2], %s151
        // Predicated region
        $region29: #{reeig_forward.1} parent=27 // pred_check
          %p153 = pneg %p66
        $region30: #{reeig_forward.1} parent=27 // pred_check_branch
          %155 = sbr.rel (%p153) target = $region32
        $region31: #{reeig_forward.1} parent=27 // pred_region
          %156 = dma.done %s149, 2048
        $region32: #{reeig_forward.1} parent=27 // pred_fallthru
          _
        %s157 = smul.u32 4, %s19
        %p158 = scmp.lt.s32.totalorder %s157, 15
        %s159 = scalar_select %p158, %s157, 15
        %s160 = scalar_lea.vmem %s0, %s159
        %p161 = pneg %p40
        %p162 = pneg %p37
        %s163 = sand.u32 %s53, 1
        %s164 = scalar_lea.sflag [#allocation3], %s163
        %s165 = sand.u32 %s53, 1
        %s166 = smul.addr %s165, 128
        %s167 = scalar_lea.vmem [#allocation2], %s166
        %p168 = pneg %p66
        %p169 = pneg %p63
        %p170 = pneg %p92
        %p171 = pneg %p89
        %s172 = sand.u32 %s79, 1
        %s173 = scalar_lea.sflag [#allocation4], %s172
        %s174 = sand.u32 %s79, 1
        %s175 = smul.addr %s174, 128
        %s176 = scalar_lea.vmem [#allocation5], %s175
        %s177 = smul.u32 4, %s19
        %p178 = scmp.lt.s32.totalorder %s177, 15
        %s179 = scalar_select %p178, %s177, 15
        %s180 = scalar_lea.vmem %s0, %s179
        %s181 = smul.u32 4, %s19
        %s182 = smul.u32 4, %s19
        %s183 = smul.u32 4, %s19
        %v184 = vld [vmem:[%s180] sm:$0x1]
        %v185 = vld [vmem:[%s180 + $0x1] sm:$0x1]
        %v186 = vld [vmem:[%s180 + $0x2] sm:$0x1]
        %v187 = vld [vmem:[%s180 + $0x3] sm:$0x1]
        %v188 = vmax.f32 %v184, 1e-05
        %v189 = vmax.f32 %v185, 1e-05
        %v190 = vmax.f32 %v186, 1e-05
        %v191 = vmax.f32 %v187, 1e-05
        %v192 = vld [vmem:[%s152] sm:$0xff]
        %v193 = vld [vmem:[%s152 + $0x8] sm:$0xff]
        %v194 = vld [vmem:[%s152 + $0x10] sm:$0xff]
        %v195 = vld [vmem:[%s152 + $0x18] sm:$0xff]
        %v196 = vld [vmem:[%s152 + $0x20] sm:$0xff]
        %v197 = vld [vmem:[%s152 + $0x28] sm:$0xff]
        %v198 = vld [vmem:[%s152 + $0x30] sm:$0xff]
        %v199 = vld [vmem:[%s152 + $0x38] sm:$0xff]
        %v200 = vld [vmem:[%s152 + $0x40] sm:$0xff]
        %v201 = vld [vmem:[%s152 + $0x48] sm:$0xff]
        %v202 = vld [vmem:[%s152 + $0x50] sm:$0xff]
        %v203 = vld [vmem:[%s152 + $0x58] sm:$0xff]
        %v204 = vld [vmem:[%s152 + $0x60] sm:$0xff]
        %v205 = vld [vmem:[%s152 + $0x68] sm:$0xff]
        %v206 = vld [vmem:[%s152 + $0x70] sm:$0xff]
        %v207 = vld [vmem:[%s152 + $0x78] sm:$0xff]
        %v212 = vlaneseq
        %v213 = vshrl.u32 %v212, 7
        %v214 = vsub.s32 0, %v213
        %v215 = vrot.slane %v188, %v214
        %v216 = vlaneseq
        %v217 = vshrl.u32 %v216, 7
        %v218 = vsub.s32 0, %v217
        %v219 = vrot.slane %v189, %v218
        %v220 = vlaneseq
        %v221 = vshrl.u32 %v220, 7
        %v222 = vsub.s32 0, %v221
        %v223 = vrot.slane %v190, %v222
        %v224 = vlaneseq
        %v225 = vshrl.u32 %v224, 7
        %v226 = vsub.s32 0, %v225
        %v227 = vrot.slane %v191, %v226
        %v232 = vmul.f32 %v192, %v215
        %v233 = vmul.f32 %v193, %v215
        %v234 = vmul.f32 %v194, %v215
        %v235 = vmul.f32 %v195, %v215
        %v236 = vmul.f32 %v196, %v219
        %v237 = vmul.f32 %v197, %v219
        %v238 = vmul.f32 %v198, %v219
        %v239 = vmul.f32 %v199, %v219
        %v240 = vmul.f32 %v200, %v223
        %v241 = vmul.f32 %v201, %v223
        %v242 = vmul.f32 %v202, %v223
        %v243 = vmul.f32 %v203, %v223
        %v244 = vmul.f32 %v204, %v227
        %v245 = vmul.f32 %v205, %v227
        %v246 = vmul.f32 %v206, %v227
        %v247 = vmul.f32 %v207, %v227
        %vm248 = vcmask 261120
        %v250 = vsel %vm248, %v232, 0
        %v253 = vsel %vm248, %v233, 0
        %v256 = vsel %vm248, %v234, 0
        %v259 = vsel %vm248, %v235, 0
        %v262 = vsel %vm248, %v192, 0
        %v265 = vsel %vm248, %v193, 0
        %v268 = vsel %vm248, %v194, 0
        %v271 = vsel %vm248, %v195, 0
        %273 = vmatprep.subr.mxu0 0.0
        %274 = vmatpush1.xpose.msra.mxu0 0.0
        %275 = vmatprep.subr.mxu0 0.0
        %276 = vmatpush1.xpose.msra.mxu0 0.0
        %277 = vmatprep.subr.mxu0 0.0
        %278 = vmatpush1.xpose.msra.mxu0 0.0
        %279 = vmatprep.subr.mxu0 0.0
        %280 = vmatpush1.xpose.msra.mxu0 0.0
        %281 = vmatprep.subr.mxu0 0.0
        %282 = vmatpush1.xpose.msra.mxu0 0.0
        %283 = vmatprep.subr.mxu0 0.0
        %284 = vmatpush1.xpose.msra.mxu0 0.0
        %285 = vmatprep.subr.mxu0 0.0
        %286 = vmatpush1.xpose.msra.mxu0 0.0
        %287 = vmatprep.subr.mxu0 0.0
        %288 = vmatpush1.xpose.msra.mxu0 0.0
        %289 = vmatprep.subr.mxu0 0.0
        %290 = vmatpush1.xpose.msra.mxu0 0.0
        %291 = vmatprep.subr.mxu0 0.0
        %292 = vmatpush1.xpose.msra.mxu0 0.0
        %293 = vmatprep.subr.mxu0 0.0
        %294 = vmatpush1.xpose.msra.mxu0 0.0
        %295 = vmatprep.subr.mxu0 0.0
        %296 = vmatpush1.xpose.msra.mxu0 0.0
        %297 = vmatprep.subr.mxu0 0.0
        %298 = vmatpush1.xpose.msra.mxu0 %v271
        %299 = vmatprep.subr.mxu0 0.0
        %300 = vmatpush1.xpose.msra.mxu0 %v268
        %301 = vmatprep.subr.mxu0 0.0
        %302 = vmatpush1.xpose.msra.mxu0 %v265
        %303 = vmatprep.subr.mxu0 0.0
        %304 = vmatpush1.xpose.msra.mxu0 %v262
        %305 = vmatprep.subr.mxu0 0.0
        %306 = vmatpush2.xpose.msra.mxu0 0.0
        %307 = vmatprep.subr.mxu0 0.0
        %308 = vmatpush2.xpose.msra.mxu0 0.0
        %309 = vmatprep.subr.mxu0 0.0
        %310 = vmatpush2.xpose.msra.mxu0 0.0
        %311 = vmatprep.subr.mxu0 0.0
        %312 = vmatpush2.xpose.msra.mxu0 0.0
        %313 = vmatprep.subr.mxu0 0.0
        %314 = vmatpush2.xpose.msra.mxu0 0.0
        %315 = vmatprep.subr.mxu0 0.0
        %316 = vmatpush2.xpose.msra.mxu0 0.0
        %317 = vmatprep.subr.mxu0 0.0
        %318 = vmatpush2.xpose.msra.mxu0 0.0
        %319 = vmatprep.subr.mxu0 0.0
        %320 = vmatpush2.xpose.msra.mxu0 0.0
        %321 = vmatprep.subr.mxu0 0.0
        %322 = vmatpush2.xpose.msra.mxu0 0.0
        %323 = vmatprep.subr.mxu0 0.0
        %324 = vmatpush2.xpose.msra.mxu0 0.0
        %325 = vmatprep.subr.mxu0 0.0
        %326 = vmatpush2.xpose.msra.mxu0 0.0
        %327 = vmatprep.subr.mxu0 0.0
        %328 = vmatpush2.xpose.msra.mxu0 0.0
        %329 = vmatprep.subr.mxu0 0.0
        %330 = vmatpush2.xpose.msra.mxu0 0.0
        %331 = vmatprep.subr.mxu0 0.0
        %332 = vmatpush2.xpose.msra.mxu0 0.0
        %333 = vmatprep.subr.mxu0 0.0
        %334 = vmatpush2.xpose.msra.mxu0 0.0
        %335 = vmatprep.subr.mxu0 0.0
        %336 = vmatpush2.xpose.msra.mxu0 0.0
        %337 = vmatprep.mubr.f32.mxu0 0.0
        %338 = vmatmul.mubr.f32.gmra.mxu0 %v250
        %v339 = vpop.f32.mrf.mxu0
        %v340 = vadd.f32 0.0, %v339
        %v341 = vpop.f32.mrf.mxu0
        %342 = vmatprep.mubr.f32.mxu0 0.0
        %343 = vmatmul.mubr.f32.gmra.mxu0 %v253
        %v344 = vpop.f32.mrf.mxu0
        %v345 = vadd.f32 0.0, %v344
        %v346 = vpop.f32.mrf.mxu0
        %347 = vmatprep.mubr.f32.mxu0 0.0
        %348 = vmatmul.mubr.f32.gmra.mxu0 %v256
        %v349 = vpop.f32.mrf.mxu0
        %v350 = vadd.f32 0.0, %v349
        %v351 = vpop.f32.mrf.mxu0
        %352 = vmatprep.mubr.f32.mxu0 0.0
        %353 = vmatmul.mubr.f32.gmra.mxu0 %v259
        %v354 = vpop.f32.mrf.mxu0
        %v355 = vadd.f32 0.0, %v354
        %v356 = vpop.f32.mrf.mxu0
        %357 = vdwg.mxu0
        %v359 = vsel %vm248, %v236, 0
        %v362 = vsel %vm248, %v237, 0
        %v365 = vsel %vm248, %v238, 0
        %v368 = vsel %vm248, %v239, 0
        %v371 = vsel %vm248, %v196, 0
        %v374 = vsel %vm248, %v197, 0
        %v377 = vsel %vm248, %v198, 0
        %v380 = vsel %vm248, %v199, 0
        %382 = vmatprep.subr.mxu0 0.0
        %383 = vmatpush1.xpose.msra.mxu0 0.0
        %384 = vmatprep.subr.mxu0 0.0
        %385 = vmatpush1.xpose.msra.mxu0 0.0
        %386 = vmatprep.subr.mxu0 0.0
        %387 = vmatpush1.xpose.msra.mxu0 0.0
        %388 = vmatprep.subr.mxu0 0.0
        %389 = vmatpush1.xpose.msra.mxu0 0.0
        %390 = vmatprep.subr.mxu0 0.0
        %391 = vmatpush1.xpose.msra.mxu0 0.0
        %392 = vmatprep.subr.mxu0 0.0
        %393 = vmatpush1.xpose.msra.mxu0 0.0
        %394 = vmatprep.subr.mxu0 0.0
        %395 = vmatpush1.xpose.msra.mxu0 0.0
        %396 = vmatprep.subr.mxu0 0.0
        %397 = vmatpush1.xpose.msra.mxu0 0.0
        %398 = vmatprep.subr.mxu0 0.0
        %399 = vmatpush1.xpose.msra.mxu0 0.0
        %400 = vmatprep.subr.mxu0 0.0
        %401 = vmatpush1.xpose.msra.mxu0 0.0
        %402 = vmatprep.subr.mxu0 0.0
        %403 = vmatpush1.xpose.msra.mxu0 0.0
        %404 = vmatprep.subr.mxu0 0.0
        %405 = vmatpush1.xpose.msra.mxu0 0.0
        %406 = vmatprep.subr.mxu0 0.0
        %407 = vmatpush1.xpose.msra.mxu0 %v380
        %408 = vmatprep.subr.mxu0 0.0
        %409 = vmatpush1.xpose.msra.mxu0 %v377
        %410 = vmatprep.subr.mxu0 0.0
        %411 = vmatpush1.xpose.msra.mxu0 %v374
        %412 = vmatprep.subr.mxu0 0.0
        %413 = vmatpush1.xpose.msra.mxu0 %v371
        %414 = vmatprep.subr.mxu0 0.0
        %415 = vmatpush2.xpose.msra.mxu0 0.0
        %416 = vmatprep.subr.mxu0 0.0
        %417 = vmatpush2.xpose.msra.mxu0 0.0
        %418 = vmatprep.subr.mxu0 0.0
        %419 = vmatpush2.xpose.msra.mxu0 0.0
        %420 = vmatprep.subr.mxu0 0.0
        %421 = vmatpush2.xpose.msra.mxu0 0.0
        %422 = vmatprep.subr.mxu0 0.0
        %423 = vmatpush2.xpose.msra.mxu0 0.0
        %424 = vmatprep.subr.mxu0 0.0
        %425 = vmatpush2.xpose.msra.mxu0 0.0
        %426 = vmatprep.subr.mxu0 0.0
        %427 = vmatpush2.xpose.msra.mxu0 0.0
        %428 = vmatprep.subr.mxu0 0.0
        %429 = vmatpush2.xpose.msra.mxu0 0.0
        %430 = vmatprep.subr.mxu0 0.0
        %431 = vmatpush2.xpose.msra.mxu0 0.0
        %432 = vmatprep.subr.mxu0 0.0
        %433 = vmatpush2.xpose.msra.mxu0 0.0
        %434 = vmatprep.subr.mxu0 0.0
        %435 = vmatpush2.xpose.msra.mxu0 0.0
        %436 = vmatprep.subr.mxu0 0.0
        %437 = vmatpush2.xpose.msra.mxu0 0.0
        %438 = vmatprep.subr.mxu0 0.0
        %439 = vmatpush2.xpose.msra.mxu0 0.0
        %440 = vmatprep.subr.mxu0 0.0
        %441 = vmatpush2.xpose.msra.mxu0 0.0
        %442 = vmatprep.subr.mxu0 0.0
        %443 = vmatpush2.xpose.msra.mxu0 0.0
        %444 = vmatprep.subr.mxu0 0.0
        %445 = vmatpush2.xpose.msra.mxu0 0.0
        %446 = vmatprep.mubr.f32.mxu0 0.0
        %447 = vmatmul.mubr.f32.gmra.mxu0 %v359
        %v448 = vpop.f32.mrf.mxu0
        %v449 = vadd.f32 0.0, %v448
        %v450 = vpop.f32.mrf.mxu0
        %451 = vmatprep.mubr.f32.mxu0 0.0
        %452 = vmatmul.mubr.f32.gmra.mxu0 %v362
        %v453 = vpop.f32.mrf.mxu0
        %v454 = vadd.f32 0.0, %v453
        %v455 = vpop.f32.mrf.mxu0
        %456 = vmatprep.mubr.f32.mxu0 0.0
        %457 = vmatmul.mubr.f32.gmra.mxu0 %v365
        %v458 = vpop.f32.mrf.mxu0
        %v459 = vadd.f32 0.0, %v458
        %v460 = vpop.f32.mrf.mxu0
        %461 = vmatprep.mubr.f32.mxu0 0.0
        %462 = vmatmul.mubr.f32.gmra.mxu0 %v368
        %v463 = vpop.f32.mrf.mxu0
        %v464 = vadd.f32 0.0, %v463
        %v465 = vpop.f32.mrf.mxu0
        %466 = vdwg.mxu0
        %v468 = vsel %vm248, %v240, 0
        %v471 = vsel %vm248, %v241, 0
        %v474 = vsel %vm248, %v242, 0
        %v477 = vsel %vm248, %v243, 0
        %v480 = vsel %vm248, %v200, 0
        %v483 = vsel %vm248, %v201, 0
        %v486 = vsel %vm248, %v202, 0
        %v489 = vsel %vm248, %v203, 0
        %491 = vmatprep.subr.mxu0 0.0
        %492 = vmatpush1.xpose.msra.mxu0 0.0
        %493 = vmatprep.subr.mxu0 0.0
        %494 = vmatpush1.xpose.msra.mxu0 0.0
        %495 = vmatprep.subr.mxu0 0.0
        %496 = vmatpush1.xpose.msra.mxu0 0.0
        %497 = vmatprep.subr.mxu0 0.0
        %498 = vmatpush1.xpose.msra.mxu0 0.0
        %499 = vmatprep.subr.mxu0 0.0
        %500 = vmatpush1.xpose.msra.mxu0 0.0
        %501 = vmatprep.subr.mxu0 0.0
        %502 = vmatpush1.xpose.msra.mxu0 0.0
        %503 = vmatprep.subr.mxu0 0.0
        %504 = vmatpush1.xpose.msra.mxu0 0.0
        %505 = vmatprep.subr.mxu0 0.0
        %506 = vmatpush1.xpose.msra.mxu0 0.0
        %507 = vmatprep.subr.mxu0 0.0
        %508 = vmatpush1.xpose.msra.mxu0 0.0
        %509 = vmatprep.subr.mxu0 0.0
        %510 = vmatpush1.xpose.msra.mxu0 0.0
        %511 = vmatprep.subr.mxu0 0.0
        %512 = vmatpush1.xpose.msra.mxu0 0.0
        %513 = vmatprep.subr.mxu0 0.0
        %514 = vmatpush1.xpose.msra.mxu0 0.0
        %515 = vmatprep.subr.mxu0 0.0
        %516 = vmatpush1.xpose.msra.mxu0 %v489
        %517 = vmatprep.subr.mxu0 0.0
        %518 = vmatpush1.xpose.msra.mxu0 %v486
        %519 = vmatprep.subr.mxu0 0.0
        %520 = vmatpush1.xpose.msra.mxu0 %v483
        %521 = vmatprep.subr.mxu0 0.0
        %522 = vmatpush1.xpose.msra.mxu0 %v480
        %523 = vmatprep.subr.mxu0 0.0
        %524 = vmatpush2.xpose.msra.mxu0 0.0
        %525 = vmatprep.subr.mxu0 0.0
        %526 = vmatpush2.xpose.msra.mxu0 0.0
        %527 = vmatprep.subr.mxu0 0.0
        %528 = vmatpush2.xpose.msra.mxu0 0.0
        %529 = vmatprep.subr.mxu0 0.0
        %530 = vmatpush2.xpose.msra.mxu0 0.0
        %531 = vmatprep.subr.mxu0 0.0
        %532 = vmatpush2.xpose.msra.mxu0 0.0
        %533 = vmatprep.subr.mxu0 0.0
        %534 = vmatpush2.xpose.msra.mxu0 0.0
        %535 = vmatprep.subr.mxu0 0.0
        %536 = vmatpush2.xpose.msra.mxu0 0.0
        %537 = vmatprep.subr.mxu0 0.0
        %538 = vmatpush2.xpose.msra.mxu0 0.0
        %539 = vmatprep.subr.mxu0 0.0
        %540 = vmatpush2.xpose.msra.mxu0 0.0
        %541 = vmatprep.subr.mxu0 0.0
        %542 = vmatpush2.xpose.msra.mxu0 0.0
        %543 = vmatprep.subr.mxu0 0.0
        %544 = vmatpush2.xpose.msra.mxu0 0.0
        %545 = vmatprep.subr.mxu0 0.0
        %546 = vmatpush2.xpose.msra.mxu0 0.0
        %547 = vmatprep.subr.mxu0 0.0
        %548 = vmatpush2.xpose.msra.mxu0 0.0
        %549 = vmatprep.subr.mxu0 0.0
        %550 = vmatpush2.xpose.msra.mxu0 0.0
        %551 = vmatprep.subr.mxu0 0.0
        %552 = vmatpush2.xpose.msra.mxu0 0.0
        %553 = vmatprep.subr.mxu0 0.0
        %554 = vmatpush2.xpose.msra.mxu0 0.0
        %555 = vmatprep.mubr.f32.mxu0 0.0
        %556 = vmatmul.mubr.f32.gmra.mxu0 %v468
        %v557 = vpop.f32.mrf.mxu0
        %v558 = vadd.f32 0.0, %v557
        %v559 = vpop.f32.mrf.mxu0
        %560 = vmatprep.mubr.f32.mxu0 0.0
        %561 = vmatmul.mubr.f32.gmra.mxu0 %v471
        %v562 = vpop.f32.mrf.mxu0
        %v563 = vadd.f32 0.0, %v562
        %v564 = vpop.f32.mrf.mxu0
        %565 = vmatprep.mubr.f32.mxu0 0.0
        %566 = vmatmul.mubr.f32.gmra.mxu0 %v474
        %v567 = vpop.f32.mrf.mxu0
        %v568 = vadd.f32 0.0, %v567
        %v569 = vpop.f32.mrf.mxu0
        %570 = vmatprep.mubr.f32.mxu0 0.0
        %571 = vmatmul.mubr.f32.gmra.mxu0 %v477
        %v572 = vpop.f32.mrf.mxu0
        %v573 = vadd.f32 0.0, %v572
        %v574 = vpop.f32.mrf.mxu0
        %575 = vdwg.mxu0
        %v577 = vsel %vm248, %v244, 0
        %v580 = vsel %vm248, %v245, 0
        %v583 = vsel %vm248, %v246, 0
        %v586 = vsel %vm248, %v247, 0
        %v589 = vsel %vm248, %v204, 0
        %v592 = vsel %vm248, %v205, 0
        %v595 = vsel %vm248, %v206, 0
        %v598 = vsel %vm248, %v207, 0
        %600 = vmatprep.subr.mxu0 0.0
        %601 = vmatpush1.xpose.msra.mxu0 0.0
        %602 = vmatprep.subr.mxu0 0.0
        %603 = vmatpush1.xpose.msra.mxu0 0.0
        %604 = vmatprep.subr.mxu0 0.0
        %605 = vmatpush1.xpose.msra.mxu0 0.0
        %606 = vmatprep.subr.mxu0 0.0
        %607 = vmatpush1.xpose.msra.mxu0 0.0
        %608 = vmatprep.subr.mxu0 0.0
        %609 = vmatpush1.xpose.msra.mxu0 0.0
        %610 = vmatprep.subr.mxu0 0.0
        %611 = vmatpush1.xpose.msra.mxu0 0.0
        %612 = vmatprep.subr.mxu0 0.0
        %613 = vmatpush1.xpose.msra.mxu0 0.0
        %614 = vmatprep.subr.mxu0 0.0
        %615 = vmatpush1.xpose.msra.mxu0 0.0
        %616 = vmatprep.subr.mxu0 0.0
        %617 = vmatpush1.xpose.msra.mxu0 0.0
        %618 = vmatprep.subr.mxu0 0.0
        %619 = vmatpush1.xpose.msra.mxu0 0.0
        %620 = vmatprep.subr.mxu0 0.0
        %621 = vmatpush1.xpose.msra.mxu0 0.0
        %622 = vmatprep.subr.mxu0 0.0
        %623 = vmatpush1.xpose.msra.mxu0 0.0
        %624 = vmatprep.subr.mxu0 0.0
        %625 = vmatpush1.xpose.msra.mxu0 %v598
        %626 = vmatprep.subr.mxu0 0.0
        %627 = vmatpush1.xpose.msra.mxu0 %v595
        %628 = vmatprep.subr.mxu0 0.0
        %629 = vmatpush1.xpose.msra.mxu0 %v592
        %630 = vmatprep.subr.mxu0 0.0
        %631 = vmatpush1.xpose.msra.mxu0 %v589
        %632 = vmatprep.subr.mxu0 0.0
        %633 = vmatpush2.xpose.msra.mxu0 0.0
        %634 = vmatprep.subr.mxu0 0.0
        %635 = vmatpush2.xpose.msra.mxu0 0.0
        %636 = vmatprep.subr.mxu0 0.0
        %637 = vmatpush2.xpose.msra.mxu0 0.0
        %638 = vmatprep.subr.mxu0 0.0
        %639 = vmatpush2.xpose.msra.mxu0 0.0
        %640 = vmatprep.subr.mxu0 0.0
        %641 = vmatpush2.xpose.msra.mxu0 0.0
        %642 = vmatprep.subr.mxu0 0.0
        %643 = vmatpush2.xpose.msra.mxu0 0.0
        %644 = vmatprep.subr.mxu0 0.0
        %645 = vmatpush2.xpose.msra.mxu0 0.0
        %646 = vmatprep.subr.mxu0 0.0
        %647 = vmatpush2.xpose.msra.mxu0 0.0
        %648 = vmatprep.subr.mxu0 0.0
        %649 = vmatpush2.xpose.msra.mxu0 0.0
        %650 = vmatprep.subr.mxu0 0.0
        %651 = vmatpush2.xpose.msra.mxu0 0.0
        %652 = vmatprep.subr.mxu0 0.0
        %653 = vmatpush2.xpose.msra.mxu0 0.0
        %654 = vmatprep.subr.mxu0 0.0
        %655 = vmatpush2.xpose.msra.mxu0 0.0
        %656 = vmatprep.subr.mxu0 0.0
        %657 = vmatpush2.xpose.msra.mxu0 0.0
        %658 = vmatprep.subr.mxu0 0.0
        %659 = vmatpush2.xpose.msra.mxu0 0.0
        %660 = vmatprep.subr.mxu0 0.0
        %661 = vmatpush2.xpose.msra.mxu0 0.0
        %662 = vmatprep.subr.mxu0 0.0
        %663 = vmatpush2.xpose.msra.mxu0 0.0
        %664 = vmatprep.mubr.f32.mxu0 0.0
        %665 = vmatmul.mubr.f32.gmra.mxu0 %v577
        %v666 = vpop.f32.mrf.mxu0
        %v667 = vadd.f32 0.0, %v666
        %v668 = vpop.f32.mrf.mxu0
        %669 = vmatprep.mubr.f32.mxu0 0.0
        %670 = vmatmul.mubr.f32.gmra.mxu0 %v580
        %v671 = vpop.f32.mrf.mxu0
        %v672 = vadd.f32 0.0, %v671
        %v673 = vpop.f32.mrf.mxu0
        %674 = vmatprep.mubr.f32.mxu0 0.0
        %675 = vmatmul.mubr.f32.gmra.mxu0 %v583
        %v676 = vpop.f32.mrf.mxu0
        %v677 = vadd.f32 0.0, %v676
        %v678 = vpop.f32.mrf.mxu0
        %679 = vmatprep.mubr.f32.mxu0 0.0
        %680 = vmatmul.mubr.f32.gmra.mxu0 %v586
        %v681 = vpop.f32.mrf.mxu0
        %v682 = vadd.f32 0.0, %v681
        %v683 = vpop.f32.mrf.mxu0
        %684 = vdwg.mxu0
        %685 = vst.msk [vmem:[%s176] sm:$0xff] %vm248, %v340
        %686 = vst.msk [vmem:[%s176 + $0x8] sm:$0xff] %vm248, %v345
        %687 = vst.msk [vmem:[%s176 + $0x10] sm:$0xff] %vm248, %v350
        %688 = vst.msk [vmem:[%s176 + $0x18] sm:$0xff] %vm248, %v355
        %689 = vst.msk [vmem:[%s176 + $0x20] sm:$0xff] %vm248, %v449
        %690 = vst.msk [vmem:[%s176 + $0x28] sm:$0xff] %vm248, %v454
        %691 = vst.msk [vmem:[%s176 + $0x30] sm:$0xff] %vm248, %v459
        %692 = vst.msk [vmem:[%s176 + $0x38] sm:$0xff] %vm248, %v464
        %693 = vst.msk [vmem:[%s176 + $0x40] sm:$0xff] %vm248, %v558
        %694 = vst.msk [vmem:[%s176 + $0x48] sm:$0xff] %vm248, %v563
        %695 = vst.msk [vmem:[%s176 + $0x50] sm:$0xff] %vm248, %v568
        %696 = vst.msk [vmem:[%s176 + $0x58] sm:$0xff] %vm248, %v573
        %697 = vst.msk [vmem:[%s176 + $0x60] sm:$0xff] %vm248, %v667
        %698 = vst.msk [vmem:[%s176 + $0x68] sm:$0xff] %vm248, %v672
        %699 = vst.msk [vmem:[%s176 + $0x70] sm:$0xff] %vm248, %v677
        %700 = vst.msk [vmem:[%s176 + $0x78] sm:$0xff] %vm248, %v682
        %s701 = sand.u32 %s79, 1
        %s702 = scalar_lea.sflag [#allocation4], %s701
        %s703 = sand.u32 %s79, 1
        %s704 = smul.addr %s703, 128
        %s705 = scalar_lea.vmem [#allocation5], %s704
        // Predicated region
        $region33: #{reeig_forward.1} parent=27 // pred_check
          %p706 = pneg %p89
        $region34: #{reeig_forward.1} parent=27 // pred_check_branch
          %708 = sbr.rel (%p706) target = $region36
        $region35: #{reeig_forward.1} parent=27 // pred_region
          %s709 = smul.u32 4, %s19
          %s711 = ssub.s32 2048, 2048
          %712 = vsyncadd %s702, %s711
          %s713 = smul.addr %s709, 4
          %s714 = smul.addr %s713, 128
          %s715 = scalar_lea.hbm %s2, %s714
          %s716 = sshll.u32 %s705, 4
          %s717 = int_to_ptr.vmem [resolvable:$true] %s716
          %722 = dma.vmem_to_hbm [thread:$0]  %s717, 2048, %s715, %s702, 128, 128, 8
        $region36: #{reeig_forward.1} parent=27 // pred_fallthru
          _
      $region28: #{reeig_forward.1} parent=5 // pred_fallthru
        _
      %p723 = scmp.le.s32.totalorder 2, %s14
      // Predicated region
      $region37: #{reeig_forward.1} parent=5 // pred_check
        %p724 = pneg %p723
      $region38: #{reeig_forward.1} parent=5 // pred_check_branch
        %726 = sbr.rel (%p724) target = $region40
      $region39: #{reeig_forward.1} parent=5 // pred_region
        %s727 = ssub.s32 %s14, 2
        // Predicated region
        $region41: #{reeig_forward.1} parent=39 // pred_check
          %p728 = pneg %p95
        $region42: #{reeig_forward.1} parent=39 // pred_check_branch
          %730 = sbr.rel (%p728) target = $region44
        $region43: #{reeig_forward.1} parent=39 // pred_region
          %s731 = sand.u32 %s80, 1
          %s732 = scalar_lea.sflag [#allocation4], %s731
          %s733 = sand.u32 %s80, 1
          %s734 = smul.addr %s733, 128
          %s735 = scalar_lea.vmem [#allocation5], %s734
          %736 = dma.done %s732, 2048
        $region44: #{reeig_forward.1} parent=39 // pred_fallthru
          _
      $region40: #{reeig_forward.1} parent=5 // pred_fallthru
        _
    $region6: #{reeig_forward.1} parent=1 // loop_footer
      %s18 = sadd.s32 1, %s14
    $region7: #{reeig_forward.1} parent=1 // loop_footer_branch
      %13 = sbr.rel target = $region3
    $region8: #{reeig_forward.1} parent=1 // loop_exit
      _
    %737 = vsyncpa [#allocation3], 1
    %s738 = scalar_lea.sflag [#allocation3], 1
    %739 = vsyncpa %s738, 1
    %740 = vsyncpa [#allocation4], 1
    %s741 = scalar_lea.sflag [#allocation4], 1
    %742 = vsyncpa %s741, 1

</llo_original>
